<compile_context>
chip_gen: v6e
topology: v6e:2x2x1
jax: 0.10.0
libtpu: 0.0.40
codegen_flags: <defaults>
</compile_context>

<pallas_src>
import jax
import jax.numpy as jnp
from jax.experimental import pallas as pl
from jax.experimental.pallas import tpu as pltpu


def mlp_policy_kernel(obs_ref, w0_ref, b0_ref, w1_ref, b1_ref, wo_ref, bo_ref,
                      mean_ref):
    """One batch-tile of the MLPPolicy mean_net forward (continuous case).

    obs:  (TB, ob_dim)
    W0:   (ob_dim, H)     b0: (1, H)
    W1:   (H, H)          b1: (1, H)
    Wo:   (H, N_pad)      bo: (1, N_pad)     (zero-padded to 128 lanes)
    out:  mean (TB, N_pad)
    """
    cdt = w0_ref.dtype  # matmul operand dtype (bf16 default, f32 optional)
    x = obs_ref[...].astype(cdt)
    # hidden layer 0: Linear + Tanh (f32 accumulation, f32 bias/activation math)
    h = jnp.tanh(
        jnp.dot(x, w0_ref[...], preferred_element_type=jnp.float32) + b0_ref[...]
    )
    # hidden layer 1: Linear + Tanh
    h = jnp.tanh(
        jnp.dot(h.astype(cdt), w1_ref[...], preferred_element_type=jnp.float32)
        + b1_ref[...]
    )
    # output layer: Linear (identity activation), lane-dense 128-wide tile
    mean = (
        jnp.dot(h.astype(cdt), wo_ref[...], preferred_element_type=jnp.float32)
        + bo_ref[...]
    )
    mean_ref[...] = mean.astype(mean_ref.dtype)


def _round_up(x, m):
    return ((x + m - 1) // m) * m


def _choose_batch_tile(B, batch_tile):
    """Batch tile: multiple of 8 (f32 obs/out), or the whole batch if it fits one tile.
    No forced multi-tile split — single-TC chips would only pay per-step overhead."""
    tb = _round_up(max(min(batch_tile, B), 8), 8)
    if tb >= B:
        return B  # one grid step; block dim == full array dim is always legal
    return tb


def _vmem_limit_bytes(TB, ob_dim, H, n_out, obs_itemsize, param_bytes):
    """Estimate VMEM demand (double-buffered obs/out, weights, f32 intermediates),
    add headroom, clamp to 48 MiB (leave headroom under v7x's 64 MiB physical VMEM)."""
    io_bytes = 2 * (TB * ob_dim * obs_itemsize + TB * n_out * 4)
    act_bytes = 4 * TB * max(H, ob_dim, n_out) * 4
    est = io_bytes + 2 * param_bytes + act_bytes
    return min(max(int(est * 2), 2 << 20), 48 << 20)


def mlp_policy_forward(obs, params, *, batch_tile=2048, weight_dtype=jnp.bfloat16):
    """Runs MLPPolicy.forward for the continuous case. Returns (mean, std)."""
    w0, b0, w1, b1, wo, bo, logstd = params
    B, ob_dim = obs.shape
    H = w0.shape[1]
    ac_dim = wo.shape[1]
    n_pad = max(128, _round_up(ac_dim, 128))  # lane-dense output width

    wdt = jnp.dtype(weight_dtype)
    # weight matrices in the compute dtype; biases stay f32 (safe on v5e: no bf16 VPU).
    w0_c = w0.astype(wdt)
    w1_c = w1.astype(wdt)
    wo_p = jnp.pad(wo.astype(wdt), ((0, 0), (0, n_pad - ac_dim)))
    b0_2d = b0.reshape(1, H).astype(jnp.float32)
    b1_2d = b1.reshape(1, H).astype(jnp.float32)
    bo_p = jnp.pad(bo.reshape(1, ac_dim).astype(jnp.float32),
                   ((0, 0), (0, n_pad - ac_dim)))

    TB = _choose_batch_tile(B, batch_tile)
    grid = (pl.cdiv(B, TB),)

    weight_args = (w0_c, b0_2d, w1_c, b1_2d, wo_p, bo_p)
    param_bytes = sum(int(p.size) * p.dtype.itemsize for p in weight_args)
    vmem_limit = _vmem_limit_bytes(TB, ob_dim, H, n_pad,
                                   obs.dtype.itemsize, param_bytes)

    cost = pl.CostEstimate(
        flops=2 * B * (ob_dim * H + H * H + H * n_pad),
        transcendentals=2 * B * H,  # two tanh hidden layers
        bytes_accessed=int(obs.size) * obs.dtype.itemsize + param_bytes
        + B * n_pad * 4,
    )

    def build_and_call(single_buffer_weights):
        if single_buffer_weights:
            # grid-invariant blocks: constant index_map, double-buffering buys nothing.
            wspec = lambda shape: pl.BlockSpec(shape, lambda i: (0, 0),
                                               pipeline_mode=pl.Buffered(1))
        else:
            wspec = lambda shape: pl.BlockSpec(shape, lambda i: (0, 0))
        return pl.pallas_call(
            mlp_policy_kernel,
            out_shape=jax.ShapeDtypeStruct((B, n_pad), jnp.float32),
            grid_spec=pltpu.PrefetchScalarGridSpec(
                num_scalar_prefetch=0,
                grid=grid,
                in_specs=[
                    pl.BlockSpec((TB, ob_dim), lambda i: (i, 0)),  # obs: batch-tiled
                    wspec((ob_dim, H)),                            # W0
                    wspec((1, H)),                                 # b0
                    wspec((H, H)),                                 # W1
                    wspec((1, H)),                                 # b1
                    wspec((H, n_pad)),                             # Wo (lane-padded)
                    wspec((1, n_pad)),                             # bo (lane-padded)
                ],
                out_specs=pl.BlockSpec((TB, n_pad), lambda i: (i, 0)),  # lane-dense mean
            ),
            compiler_params=pltpu.CompilerParams(
                dimension_semantics=("parallel",),
                vmem_limit_bytes=vmem_limit,
            ),
            cost_estimate=cost,
        )(obs, *weight_args)

    try:
        mean_padded = build_and_call(True)
    except Exception:
        # Fallback: if this jax version rejects Buffered(1) on grid-invariant inputs,
        # use default double-buffering (correctness identical, slightly more VMEM).
        mean_padded = build_and_call(False)

    mean = mean_padded[:, :ac_dim]
    # std = exp(logstd): batch-invariant, computed once outside the kernel.
    std = jnp.broadcast_to(jnp.exp(logstd.astype(jnp.float32)), mean.shape)
    return mean, std


def init_params(key, ob_dim, ac_dim, n_layers, layer_size):
    """Deterministic init mimicking PyTorch nn.Linear default (U(-1/sqrt(fan_in), ...)).

    Weights are stored as [in, out] (transposed vs. PyTorch) so the kernel does x @ W.
    """
    assert n_layers == 2, "script builds the n_layers=2 configuration"
    keys = jax.random.split(key, 6)

    def linear(kw, kb, fan_in, fan_out):
        bound = 1.0 / jnp.sqrt(jnp.float32(fan_in))
        w = jax.random.uniform(kw, (fan_in, fan_out), jnp.float32, -bound, bound)
        b = jax.random.uniform(kb, (fan_out,), jnp.float32, -bound, bound)
        return w, b

    w0, b0 = linear(keys[0], keys[1], ob_dim, layer_size)
    w1, b1 = linear(keys[2], keys[3], layer_size, layer_size)
    wo, bo = linear(keys[4], keys[5], layer_size, ac_dim)
    logstd = jnp.zeros((ac_dim,), jnp.float32)  # nn.Parameter(torch.zeros(ac_dim))
    return (w0, b0, w1, b1, wo, bo, logstd)


def reference_forward(obs, params):
    """Pure-JAX reference of MLPPolicy.forward (continuous)."""
    w0, b0, w1, b1, wo, bo, logstd = params
    h = jnp.tanh(obs @ w0 + b0)
    h = jnp.tanh(h @ w1 + b1)
    mean = h @ wo + bo
    std = jnp.broadcast_to(jnp.exp(logstd), mean.shape)
    return mean, std


if __name__ == "__main__":
    # shapes consistent with the module's __init__ (small, hw2-style policy net).
    B, ob_dim, ac_dim = 256, 16, 4
    n_layers, layer_size = 2, 32

    key = jax.random.PRNGKey(0)
    k_obs, k_params = jax.random.split(key)
    obs = jax.random.normal(k_obs, (B, ob_dim), jnp.float32)
    params = init_params(k_params, ob_dim, ac_dim, n_layers, layer_size)

    ref_mean, ref_std = reference_forward(obs, params)

    # Default path: bf16 weights, f32 accumulation, lane-dense padded output, grid=(1,).
    mean, std = jax.block_until_ready(mlp_policy_forward(obs, params))
    assert mean.shape == (B, ac_dim) and std.shape == (B, ac_dim)
    assert jnp.allclose(mean, ref_mean, atol=5e-2, rtol=5e-2)
    assert jnp.allclose(std, ref_std, atol=1e-6, rtol=1e-6)

    # f32-weight path (numerically tight vs. reference).
    mean32, std32 = jax.block_until_ready(
        mlp_policy_forward(obs, params, weight_dtype=jnp.float32))
    assert jnp.allclose(mean32, ref_mean, atol=1e-4, rtol=1e-4)
    assert jnp.allclose(std32, ref_std, atol=1e-6, rtol=1e-6)

    # Multi-step grid (batch split over several tiles) still matches.
    mean_t, _ = jax.block_until_ready(
        mlp_policy_forward(obs, params, batch_tile=64, weight_dtype=jnp.float32))
    assert jnp.allclose(mean_t, ref_mean, atol=1e-4, rtol=1e-4)

    # TODO(synk): Normal(mean, std).sample() in get_action is RNG sampling outside the
    # forward hot path; left to the caller (mean + std * jax.random.normal). The discrete
    # branch (Categorical over logits) would reuse the same kernel without logstd.
    print("KERNEL_OK")
</pallas_src>

<mosaic_0001>
module attributes {stable_mosaic.version = 11 : i64} {
  func.func @mlp_policy_kernel(%arg0: i32, %arg1: memref<256x16xf32, #tpu.memory_space<vmem>>, %arg2: memref<16x32xbf16, #tpu.memory_space<vmem>>, %arg3: memref<1x32xf32, #tpu.memory_space<vmem>>, %arg4: memref<32x32xbf16, #tpu.memory_space<vmem>>, %arg5: memref<1x32xf32, #tpu.memory_space<vmem>>, %arg6: memref<32x128xbf16, #tpu.memory_space<vmem>>, %arg7: memref<1x128xf32, #tpu.memory_space<vmem>>, %arg8: memref<256x128xf32, #tpu.memory_space<vmem>>) attributes {dimension_semantics = [#tpu.dimension_semantics<parallel>], iteration_bounds = array<i64: 1>, scalar_prefetch = 0 : i64, scratch_operands = 0 : i64, tpu.core_type = #tpu.core_type<tc>, window_params = [{transform_indices = @transform_0, window_bounds = array<i64: 256, 16>}, {pipeline_mode = #tpu.pipeline_mode<synchronous>, transform_indices = @transform_1, window_bounds = array<i64: 16, 32>}, {pipeline_mode = #tpu.pipeline_mode<synchronous>, transform_indices = @transform_2, window_bounds = array<i64: 1, 32>}, {pipeline_mode = #tpu.pipeline_mode<synchronous>, transform_indices = @transform_3, window_bounds = array<i64: 32, 32>}, {pipeline_mode = #tpu.pipeline_mode<synchronous>, transform_indices = @transform_4, window_bounds = array<i64: 1, 32>}, {pipeline_mode = #tpu.pipeline_mode<synchronous>, transform_indices = @transform_5, window_bounds = array<i64: 32, 128>}, {pipeline_mode = #tpu.pipeline_mode<synchronous>, transform_indices = @transform_6, window_bounds = array<i64: 1, 128>}, {transform_indices = @transform_7, window_bounds = array<i64: 256, 128>}]} {
    %c0 = arith.constant 0 : index
    %c0_0 = arith.constant 0 : index
    %0 = vector.load %arg1[%c0, %c0_0] : memref<256x16xf32, #tpu.memory_space<vmem>>, vector<256x16xf32>
    %1 = arith.truncf %0 : vector<256x16xf32> to vector<256x16xbf16>
    %c0_1 = arith.constant 0 : index
    %c0_2 = arith.constant 0 : index
    %2 = vector.load %arg2[%c0_1, %c0_2] : memref<16x32xbf16, #tpu.memory_space<vmem>>, vector<16x32xbf16>
    %cst = arith.constant dense<0.000000e+00> : vector<256x32xf32>
    %3 = tpu.matmul %1, %2, %cst {dimension_numbers = #tpu.dot_dimension_numbers<[1], [0], [0], [1], [0, 0, 1, 1], [], []>} : vector<256x16xbf16>, vector<16x32xbf16>, vector<256x32xf32> -> vector<256x32xf32>
    %c0_3 = arith.constant 0 : index
    %c0_4 = arith.constant 0 : index
    %4 = vector.load %arg3[%c0_3, %c0_4] : memref<1x32xf32, #tpu.memory_space<vmem>>, vector<1x32xf32>
    %5 = vector.broadcast %4 : vector<1x32xf32> to vector<256x32xf32>
    %6 = arith.addf %3, %5 : vector<256x32xf32>
    %7 = math.tanh %6 : vector<256x32xf32>
    %8 = arith.truncf %7 : vector<256x32xf32> to vector<256x32xbf16>
    %c0_5 = arith.constant 0 : index
    %c0_6 = arith.constant 0 : index
    %9 = vector.load %arg4[%c0_5, %c0_6] : memref<32x32xbf16, #tpu.memory_space<vmem>>, vector<32x32xbf16>
    %cst_7 = arith.constant dense<0.000000e+00> : vector<256x32xf32>
    %10 = tpu.matmul %8, %9, %cst_7 {dimension_numbers = #tpu.dot_dimension_numbers<[1], [0], [0], [1], [0, 0, 1, 1], [], []>} : vector<256x32xbf16>, vector<32x32xbf16>, vector<256x32xf32> -> vector<256x32xf32>
    %c0_8 = arith.constant 0 : index
    %c0_9 = arith.constant 0 : index
    %11 = vector.load %arg5[%c0_8, %c0_9] : memref<1x32xf32, #tpu.memory_space<vmem>>, vector<1x32xf32>
    %12 = vector.broadcast %11 : vector<1x32xf32> to vector<256x32xf32>
    %13 = arith.addf %10, %12 : vector<256x32xf32>
    %14 = math.tanh %13 : vector<256x32xf32>
    %15 = arith.truncf %14 : vector<256x32xf32> to vector<256x32xbf16>
    %c0_10 = arith.constant 0 : index
    %c0_11 = arith.constant 0 : index
    %16 = vector.load %arg6[%c0_10, %c0_11] : memref<32x128xbf16, #tpu.memory_space<vmem>>, vector<32x128xbf16>
    %cst_12 = arith.constant dense<0.000000e+00> : vector<256x128xf32>
    %17 = tpu.matmul %15, %16, %cst_12 {dimension_numbers = #tpu.dot_dimension_numbers<[1], [0], [0], [1], [0, 0, 1, 1], [], []>} : vector<256x32xbf16>, vector<32x128xbf16>, vector<256x128xf32> -> vector<256x128xf32>
    %c0_13 = arith.constant 0 : index
    %c0_14 = arith.constant 0 : index
    %18 = vector.load %arg7[%c0_13, %c0_14] : memref<1x128xf32, #tpu.memory_space<vmem>>, vector<1x128xf32>
    %19 = vector.broadcast %18 : vector<1x128xf32> to vector<256x128xf32>
    %20 = arith.addf %17, %19 : vector<256x128xf32>
    %c0_15 = arith.constant 0 : index
    %c0_16 = arith.constant 0 : index
    %21 = vector.load %arg8[%c0_15, %c0_16] : memref<256x128xf32, #tpu.memory_space<vmem>>, vector<256x128xf32>
    tpu.vector_store %arg8[%c0_15, %c0_16], %20 {strides = array<i32>} : memref<256x128xf32, #tpu.memory_space<vmem>>, vector<256x128xf32>,
    return
  }
  func.func @transform_0(%arg0: i32) -> (i32, i32) {
    %c0_i32 = arith.constant 0 : i32
    %c0_i32_0 = arith.constant 0 : i32
    return %arg0, %c0_i32 : i32, i32
  }
  func.func @transform_1(%arg0: i32) -> (i32, i32) {
    %c0_i32 = arith.constant 0 : i32
    %c0_i32_0 = arith.constant 0 : i32
    %c0_i32_1 = arith.constant 0 : i32
    return %c0_i32, %c0_i32_0 : i32, i32
  }
  func.func @transform_2(%arg0: i32) -> (i32, i32) {
    %c0_i32 = arith.constant 0 : i32
    %c0_i32_0 = arith.constant 0 : i32
    %c0_i32_1 = arith.constant 0 : i32
    return %c0_i32, %c0_i32_0 : i32, i32
  }
  func.func @transform_3(%arg0: i32) -> (i32, i32) {
    %c0_i32 = arith.constant 0 : i32
    %c0_i32_0 = arith.constant 0 : i32
    %c0_i32_1 = arith.constant 0 : i32
    return %c0_i32, %c0_i32_0 : i32, i32
  }
  func.func @transform_4(%arg0: i32) -> (i32, i32) {
    %c0_i32 = arith.constant 0 : i32
    %c0_i32_0 = arith.constant 0 : i32
    %c0_i32_1 = arith.constant 0 : i32
    return %c0_i32, %c0_i32_0 : i32, i32
  }
  func.func @transform_5(%arg0: i32) -> (i32, i32) {
    %c0_i32 = arith.constant 0 : i32
    %c0_i32_0 = arith.constant 0 : i32
    %c0_i32_1 = arith.constant 0 : i32
    return %c0_i32, %c0_i32_0 : i32, i32
  }
  func.func @transform_6(%arg0: i32) -> (i32, i32) {
    %c0_i32 = arith.constant 0 : i32
    %c0_i32_0 = arith.constant 0 : i32
    %c0_i32_1 = arith.constant 0 : i32
    return %c0_i32, %c0_i32_0 : i32, i32
  }
  func.func @transform_7(%arg0: i32) -> (i32, i32) {
    %c0_i32 = arith.constant 0 : i32
    %c0_i32_0 = arith.constant 0 : i32
    return %arg0, %c0_i32 : i32, i32
  }
}

module attributes {stable_mosaic.version = 11 : i64} {
  func.func @mlp_policy_kernel(%arg0: i32, %arg1: memref<256x16xf32, #tpu.memory_space<vmem>>, %arg2: memref<16x32xbf16, #tpu.memory_space<vmem>>, %arg3: memref<1x32xf32, #tpu.memory_space<vmem>>, %arg4: memref<32x32xbf16, #tpu.memory_space<vmem>>, %arg5: memref<1x32xf32, #tpu.memory_space<vmem>>, %arg6: memref<32x128xbf16, #tpu.memory_space<vmem>>, %arg7: memref<1x128xf32, #tpu.memory_space<vmem>>, %arg8: memref<256x128xf32, #tpu.memory_space<vmem>>) attributes {dimension_semantics = [#tpu.dimension_semantics<parallel>], iteration_bounds = array<i64: 1>, scalar_prefetch = 0 : i64, scratch_operands = 0 : i64, tpu.core_type = #tpu.core_type<tc>, window_params = [{transform_indices = @transform_0, window_bounds = array<i64: 256, 16>}, {pipeline_mode = #tpu.pipeline_mode<synchronous>, transform_indices = @transform_1, window_bounds = array<i64: 16, 32>}, {pipeline_mode = #tpu.pipeline_mode<synchronous>, transform_indices = @transform_2, window_bounds = array<i64: 1, 32>}, {pipeline_mode = #tpu.pipeline_mode<synchronous>, transform_indices = @transform_3, window_bounds = array<i64: 32, 32>}, {pipeline_mode = #tpu.pipeline_mode<synchronous>, transform_indices = @transform_4, window_bounds = array<i64: 1, 32>}, {pipeline_mode = #tpu.pipeline_mode<synchronous>, transform_indices = @transform_5, window_bounds = array<i64: 32, 128>}, {pipeline_mode = #tpu.pipeline_mode<synchronous>, transform_indices = @transform_6, window_bounds = array<i64: 1, 128>}, {transform_indices = @transform_7, window_bounds = array<i64: 256, 128>}]} {
    %c0 = arith.constant 0 : index
    %c0_0 = arith.constant 0 : index
    %0 = vector.load %arg1[%c0, %c0_0] : memref<256x16xf32, #tpu.memory_space<vmem>>, vector<256x16xf32>
    %1 = arith.truncf %0 : vector<256x16xf32> to vector<256x16xbf16>
    %c0_1 = arith.constant 0 : index
    %c0_2 = arith.constant 0 : index
    %2 = vector.load %arg2[%c0_1, %c0_2] : memref<16x32xbf16, #tpu.memory_space<vmem>>, vector<16x32xbf16>
    %cst = arith.constant dense<0.000000e+00> : vector<256x32xf32>
    %3 = tpu.matmul %1, %2, %cst {dimension_numbers = #tpu.dot_dimension_numbers<[1], [0], [0], [1], [0, 0, 1, 1], [], []>} : vector<256x16xbf16>, vector<16x32xbf16>, vector<256x32xf32> -> vector<256x32xf32>
    %c0_3 = arith.constant 0 : index
    %c0_4 = arith.constant 0 : index
    %4 = vector.load %arg3[%c0_3, %c0_4] : memref<1x32xf32, #tpu.memory_space<vmem>>, vector<1x32xf32>
    %5 = vector.broadcast %4 : vector<1x32xf32> to vector<256x32xf32>
    %6 = arith.addf %3, %5 : vector<256x32xf32>
    %7 = math.tanh %6 : vector<256x32xf32>
    %8 = arith.truncf %7 : vector<256x32xf32> to vector<256x32xbf16>
    %c0_5 = arith.constant 0 : index
    %c0_6 = arith.constant 0 : index
    %9 = vector.load %arg4[%c0_5, %c0_6] : memref<32x32xbf16, #tpu.memory_space<vmem>>, vector<32x32xbf16>
    %cst_7 = arith.constant dense<0.000000e+00> : vector<256x32xf32>
    %10 = tpu.matmul %8, %9, %cst_7 {dimension_numbers = #tpu.dot_dimension_numbers<[1], [0], [0], [1], [0, 0, 1, 1], [], []>} : vector<256x32xbf16>, vector<32x32xbf16>, vector<256x32xf32> -> vector<256x32xf32>
    %c0_8 = arith.constant 0 : index
    %c0_9 = arith.constant 0 : index
    %11 = vector.load %arg5[%c0_8, %c0_9] : memref<1x32xf32, #tpu.memory_space<vmem>>, vector<1x32xf32>
    %12 = vector.broadcast %11 : vector<1x32xf32> to vector<256x32xf32>
    %13 = arith.addf %10, %12 : vector<256x32xf32>
    %14 = math.tanh %13 : vector<256x32xf32>
    %15 = arith.truncf %14 : vector<256x32xf32> to vector<256x32xbf16>
    %c0_10 = arith.constant 0 : index
    %c0_11 = arith.constant 0 : index
    %16 = vector.load %arg6[%c0_10, %c0_11] : memref<32x128xbf16, #tpu.memory_space<vmem>>, vector<32x128xbf16>
    %cst_12 = arith.constant dense<0.000000e+00> : vector<256x128xf32>
    %17 = tpu.matmul %15, %16, %cst_12 {dimension_numbers = #tpu.dot_dimension_numbers<[1], [0], [0], [1], [0, 0, 1, 1], [], []>} : vector<256x32xbf16>, vector<32x128xbf16>, vector<256x128xf32> -> vector<256x128xf32>
    %c0_13 = arith.constant 0 : index
    %c0_14 = arith.constant 0 : index
    %18 = vector.load %arg7[%c0_13, %c0_14] : memref<1x128xf32, #tpu.memory_space<vmem>>, vector<1x128xf32>
    %19 = vector.broadcast %18 : vector<1x128xf32> to vector<256x128xf32>
    %20 = arith.addf %17, %19 : vector<256x128xf32>
    %c0_15 = arith.constant 0 : index
    %c0_16 = arith.constant 0 : index
    %21 = vector.load %arg8[%c0_15, %c0_16] : memref<256x128xf32, #tpu.memory_space<vmem>>, vector<256x128xf32>
    tpu.vector_store %arg8[%c0_15, %c0_16], %20 {strides = array<i32>} : memref<256x128xf32, #tpu.memory_space<vmem>>, vector<256x128xf32>,
    return
  }
  func.func @transform_0(%arg0: i32) -> (i32, i32) {
    %c0_i32 = arith.constant 0 : i32
    %c0_i32_0 = arith.constant 0 : i32
    return %arg0, %c0_i32 : i32, i32
  }
  func.func @transform_1(%arg0: i32) -> (i32, i32) {
    %c0_i32 = arith.constant 0 : i32
    %c0_i32_0 = arith.constant 0 : i32
    %c0_i32_1 = arith.constant 0 : i32
    return %c0_i32, %c0_i32_0 : i32, i32
  }
  func.func @transform_2(%arg0: i32) -> (i32, i32) {
    %c0_i32 = arith.constant 0 : i32
    %c0_i32_0 = arith.constant 0 : i32
    %c0_i32_1 = arith.constant 0 : i32
    return %c0_i32, %c0_i32_0 : i32, i32
  }
  func.func @transform_3(%arg0: i32) -> (i32, i32) {
    %c0_i32 = arith.constant 0 : i32
    %c0_i32_0 = arith.constant 0 : i32
    %c0_i32_1 = arith.constant 0 : i32
    return %c0_i32, %c0_i32_0 : i32, i32
  }
  func.func @transform_4(%arg0: i32) -> (i32, i32) {
    %c0_i32 = arith.constant 0 : i32
    %c0_i32_0 = arith.constant 0 : i32
    %c0_i32_1 = arith.constant 0 : i32
    return %c0_i32, %c0_i32_0 : i32, i32
  }
  func.func @transform_5(%arg0: i32) -> (i32, i32) {
    %c0_i32 = arith.constant 0 : i32
    %c0_i32_0 = arith.constant 0 : i32
    %c0_i32_1 = arith.constant 0 : i32
    return %c0_i32, %c0_i32_0 : i32, i32
  }
  func.func @transform_6(%arg0: i32) -> (i32, i32) {
    %c0_i32 = arith.constant 0 : i32
    %c0_i32_0 = arith.constant 0 : i32
    %c0_i32_1 = arith.constant 0 : i32
    return %c0_i32, %c0_i32_0 : i32, i32
  }
  func.func @transform_7(%arg0: i32) -> (i32, i32) {
    %c0_i32 = arith.constant 0 : i32
    %c0_i32_0 = arith.constant 0 : i32
    return %arg0, %c0_i32 : i32, i32
  }
}

</mosaic_0001>

<llo_original>
// kernel: tpu_custom_call.1
$region0: #{tpu_custom_call.1}
  #allocation0 [shape = 'u32[]', space=smem, size = 0x4, offset = 0x4, fixed_abs, tag = 'smem constant byte address 0x4 - core index']
  #allocation1 [shape = 'u32[144,128]{1,0:T(1,128)}', space=vmem, size = 0x12000, scoped, tag = 'internal scratch']
  %s0 = inlined_call_operand.vmem [shape: f32[256,16], index: 0, kind: input, shape index: {}]
  %s1 = inlined_call_operand.vmem [shape: bf16[16,32], index: 1, kind: input, shape index: {}]
  %s2 = inlined_call_operand.vmem [shape: f32[1,32], index: 2, kind: input, shape index: {}]
  %s3 = inlined_call_operand.vmem [shape: bf16[32,32], index: 3, kind: input, shape index: {}]
  %s4 = inlined_call_operand.vmem [shape: f32[1,32], index: 4, kind: input, shape index: {}]
  %s5 = inlined_call_operand.vmem [shape: bf16[32,128], index: 5, kind: input, shape index: {}]
  %s6 = inlined_call_operand.vmem [shape: f32[1,128], index: 6, kind: input, shape index: {}]
  %s7 = inlined_call_operand.hbm [shape: f32[256,128], index: 7, kind: output, shape index: {}]
  %s8 = sld [smem:[#allocation0]]
  $region38: #{tpu_custom_call.1} parent=0
    _
  %s10 = ssub.s32 1, %s8
  %s11 = scalar_select 0, %s10, %s8
  $region1: #{tpu_custom_call.1} parent=0
    #allocation2 [shape = 'u8[131072]{0}', space=vmem, size = 0x20000, scoped, tag = 'output window, operand 0, single buffered']
    #allocation3 [shape = 's32[1]{0}', space=sflag, size = 0x4, scoped, tag = 'scoped memory for tpu_custom_call.1']
    %12 = vsyncpa [#allocation3], 0
    // Predicated region
    $region2: #{tpu_custom_call.1} parent=1 // pred_check
      _
    $region3: #{tpu_custom_call.1} parent=1 // pred_check_branch
      %14 = sbr.rel (0) target = $region5
    $region4: #{tpu_custom_call.1} parent=1 // pred_region
      _
    $region5: #{tpu_custom_call.1} parent=1 // pred_fallthru
      _
    // Predicated region
    $region6: #{tpu_custom_call.1} parent=1 // pred_check
      _
    $region7: #{tpu_custom_call.1} parent=1 // pred_check_branch
      %16 = sbr.rel (0) target = $region9
    $region8: #{tpu_custom_call.1} parent=1 // pred_region
      _
    $region9: #{tpu_custom_call.1} parent=1 // pred_fallthru
      _
    // Predicated region
    $region10: #{tpu_custom_call.1} parent=1 // pred_check
      _
    $region11: #{tpu_custom_call.1} parent=1 // pred_check_branch
      %18 = sbr.rel (0) target = $region13
    $region12: #{tpu_custom_call.1} parent=1 // pred_region
      _
    $region13: #{tpu_custom_call.1} parent=1 // pred_fallthru
      _
    // Predicated region
    $region14: #{tpu_custom_call.1} parent=1 // pred_check
      _
    $region15: #{tpu_custom_call.1} parent=1 // pred_check_branch
      %20 = sbr.rel (0) target = $region17
    $region16: #{tpu_custom_call.1} parent=1 // pred_region
      _
    $region17: #{tpu_custom_call.1} parent=1 // pred_fallthru
      _
    // Predicated region
    $region18: #{tpu_custom_call.1} parent=1 // pred_check
      _
    $region19: #{tpu_custom_call.1} parent=1 // pred_check_branch
      %22 = sbr.rel (0) target = $region21
    $region20: #{tpu_custom_call.1} parent=1 // pred_region
      _
    $region21: #{tpu_custom_call.1} parent=1 // pred_fallthru
      _
    // Predicated region
    $region22: #{tpu_custom_call.1} parent=1 // pred_check
      _
    $region23: #{tpu_custom_call.1} parent=1 // pred_check_branch
      %24 = sbr.rel (0) target = $region25
    $region24: #{tpu_custom_call.1} parent=1 // pred_region
      _
    $region25: #{tpu_custom_call.1} parent=1 // pred_fallthru
      _
    // Predicated region
    $region26: #{tpu_custom_call.1} parent=1 // pred_check
      _
    $region27: #{tpu_custom_call.1} parent=1 // pred_check_branch
      %26 = sbr.rel (0) target = $region29
    $region28: #{tpu_custom_call.1} parent=1 // pred_region
      _
    $region29: #{tpu_custom_call.1} parent=1 // pred_fallthru
      _
    %v28 = vld [vmem:[%s0] sm:$0xff]
    %v29 = vld [vmem:[%s0 + $0x8] sm:$0xff]
    %v30 = vld [vmem:[%s0 + $0x10] sm:$0xff]
    %v31 = vld [vmem:[%s0 + $0x18] sm:$0xff]
    %v32 = vld [vmem:[%s0 + $0x20] sm:$0xff]
    %v33 = vld [vmem:[%s0 + $0x28] sm:$0xff]
    %v34 = vld [vmem:[%s0 + $0x30] sm:$0xff]
    %v35 = vld [vmem:[%s0 + $0x38] sm:$0xff]
    %v36 = vld [vmem:[%s0 + $0x40] sm:$0xff]
    %v37 = vld [vmem:[%s0 + $0x48] sm:$0xff]
    %v38 = vld [vmem:[%s0 + $0x50] sm:$0xff]
    %v39 = vld [vmem:[%s0 + $0x58] sm:$0xff]
    %v40 = vld [vmem:[%s0 + $0x60] sm:$0xff]
    %v41 = vld [vmem:[%s0 + $0x68] sm:$0xff]
    %v42 = vld [vmem:[%s0 + $0x70] sm:$0xff]
    %v43 = vld [vmem:[%s0 + $0x78] sm:$0xff]
    %v44 = vld [vmem:[%s0 + $0x80] sm:$0xff]
    %v45 = vld [vmem:[%s0 + $0x88] sm:$0xff]
    %v46 = vld [vmem:[%s0 + $0x90] sm:$0xff]
    %v47 = vld [vmem:[%s0 + $0x98] sm:$0xff]
    %v48 = vld [vmem:[%s0 + $0xa0] sm:$0xff]
    %v49 = vld [vmem:[%s0 + $0xa8] sm:$0xff]
    %v50 = vld [vmem:[%s0 + $0xb0] sm:$0xff]
    %v51 = vld [vmem:[%s0 + $0xb8] sm:$0xff]
    %v52 = vld [vmem:[%s0 + $0xc0] sm:$0xff]
    %v53 = vld [vmem:[%s0 + $0xc8] sm:$0xff]
    %v54 = vld [vmem:[%s0 + $0xd0] sm:$0xff]
    %v55 = vld [vmem:[%s0 + $0xd8] sm:$0xff]
    %v56 = vld [vmem:[%s0 + $0xe0] sm:$0xff]
    %v57 = vld [vmem:[%s0 + $0xe8] sm:$0xff]
    %v58 = vld [vmem:[%s0 + $0xf0] sm:$0xff]
    %v59 = vld [vmem:[%s0 + $0xf8] sm:$0xff]
    %v60 = vpack.c.bf16 %v29, %v28
    %v61 = vpack.c.bf16 %v31, %v30
    %v62 = vpack.c.bf16 %v33, %v32
    %v63 = vpack.c.bf16 %v35, %v34
    %v64 = vpack.c.bf16 %v37, %v36
    %v65 = vpack.c.bf16 %v39, %v38
    %v66 = vpack.c.bf16 %v41, %v40
    %v67 = vpack.c.bf16 %v43, %v42
    %v68 = vpack.c.bf16 %v45, %v44
    %v69 = vpack.c.bf16 %v47, %v46
    %v70 = vpack.c.bf16 %v49, %v48
    %v71 = vpack.c.bf16 %v51, %v50
    %v72 = vpack.c.bf16 %v53, %v52
    %v73 = vpack.c.bf16 %v55, %v54
    %v74 = vpack.c.bf16 %v57, %v56
    %v75 = vpack.c.bf16 %v59, %v58
    %v76 = vld [vmem:[%s1] sm:$0xf]
    %v77 = vld [vmem:[%s1 + $0x4] sm:$0xf]
    %v78 = vld [vmem:[%s2] sm:$0x1]
    %v80 = vlaneseq
    %v81 = vshrl.u32 %v80, 7
    %v82 = vsub.s32 0, %v81
    %v83 = vrot.slane %v78, %v82
    %v87 = vunpack.c.l.b16 %v76
    %v88 = vunpack.c.l.b16 %v77
    %v89 = vpack.c.b16 %v88, %v87
    %vm91 = vcmask 130048
    %v93 = vsel %vm91, %v60, 0
    %v96 = vsel %vm91, %v61, 0
    %v99 = vsel %vm91, %v62, 0
    %v102 = vsel %vm91, %v63, 0
    %v105 = vsel %vm91, %v64, 0
    %v108 = vsel %vm91, %v65, 0
    %v111 = vsel %vm91, %v66, 0
    %v114 = vsel %vm91, %v67, 0
    %v117 = vsel %vm91, %v68, 0
    %v120 = vsel %vm91, %v69, 0
    %v123 = vsel %vm91, %v70, 0
    %v126 = vsel %vm91, %v71, 0
    %v129 = vsel %vm91, %v72, 0
    %v132 = vsel %vm91, %v73, 0
    %v135 = vsel %vm91, %v74, 0
    %v138 = vsel %vm91, %v75, 0
    %140 = vmatprep.subr.bf16.mxu0 0
    %141 = vmatpush1.bf16.msra.mxu0 0
    %142 = vmatprep.subr.bf16.mxu0 0
    %143 = vmatpush1.bf16.msra.mxu0 0
    %144 = vmatprep.subr.bf16.mxu0 0
    %145 = vmatpush1.bf16.msra.mxu0 0
    %146 = vmatprep.subr.bf16.mxu0 0
    %147 = vmatpush1.bf16.msra.mxu0 0
    %148 = vmatprep.subr.bf16.mxu0 0
    %149 = vmatpush1.bf16.msra.mxu0 0
    %150 = vmatprep.subr.bf16.mxu0 0
    %151 = vmatpush1.bf16.msra.mxu0 0
    %152 = vmatprep.subr.bf16.mxu0 0
    %153 = vmatpush1.bf16.msra.mxu0 0
    %154 = vmatprep.subr.bf16.mxu0 0
    %155 = vmatpush1.bf16.msra.mxu0 %v89
    %156 = vmatprep.subr.bf16.mxu0 0
    %157 = vmatpush2.bf16.msra.mxu0 0
    %158 = vmatprep.subr.bf16.mxu0 0
    %159 = vmatpush2.bf16.msra.mxu0 0
    %160 = vmatprep.subr.bf16.mxu0 0
    %161 = vmatpush2.bf16.msra.mxu0 0
    %162 = vmatprep.subr.bf16.mxu0 0
    %163 = vmatpush2.bf16.msra.mxu0 0
    %164 = vmatprep.subr.bf16.mxu0 0
    %165 = vmatpush2.bf16.msra.mxu0 0
    %166 = vmatprep.subr.bf16.mxu0 0
    %167 = vmatpush2.bf16.msra.mxu0 0
    %168 = vmatprep.subr.bf16.mxu0 0
    %169 = vmatpush2.bf16.msra.mxu0 0
    %170 = vmatprep.subr.bf16.mxu0 0
    %171 = vmatpush2.bf16.msra.mxu0 0
    %172 = vmatprep.mubr.bf16.mxu0 0
    %173 = vmatmul.mubr.bf16.gmra.mxu0 %v93
    %v174 = vpop.f32.mrf.mxu0
    %v175 = vadd.f32 %v83, %v174
    %v176 = vpop.f32.mrf.mxu0
    %v177 = vpop.f32.mrf.mxu0
    %v178 = vadd.f32 %v83, %v177
    %v179 = vpop.f32.mrf.mxu0
    %180 = vmatprep.mubr.bf16.mxu0 0
    %181 = vmatmul.mubr.bf16.gmra.mxu0 %v96
    %v182 = vpop.f32.mrf.mxu0
    %v183 = vadd.f32 %v83, %v182
    %v184 = vpop.f32.mrf.mxu0
    %v185 = vpop.f32.mrf.mxu0
    %v186 = vadd.f32 %v83, %v185
    %v187 = vpop.f32.mrf.mxu0
    %188 = vmatprep.mubr.bf16.mxu0 0
    %189 = vmatmul.mubr.bf16.gmra.mxu0 %v99
    %v190 = vpop.f32.mrf.mxu0
    %v191 = vadd.f32 %v83, %v190
    %v192 = vpop.f32.mrf.mxu0
    %v193 = vpop.f32.mrf.mxu0
    %v194 = vadd.f32 %v83, %v193
    %v195 = vpop.f32.mrf.mxu0
    %196 = vmatprep.mubr.bf16.mxu0 0
    %197 = vmatmul.mubr.bf16.gmra.mxu0 %v102
    %v198 = vpop.f32.mrf.mxu0
    %v199 = vadd.f32 %v83, %v198
    %v200 = vpop.f32.mrf.mxu0
    %v201 = vpop.f32.mrf.mxu0
    %v202 = vadd.f32 %v83, %v201
    %v203 = vpop.f32.mrf.mxu0
    %204 = vmatprep.mubr.bf16.mxu0 0
    %205 = vmatmul.mubr.bf16.gmra.mxu0 %v105
    %v206 = vpop.f32.mrf.mxu0
    %v207 = vadd.f32 %v83, %v206
    %v208 = vpop.f32.mrf.mxu0
    %v209 = vpop.f32.mrf.mxu0
    %v210 = vadd.f32 %v83, %v209
    %v211 = vpop.f32.mrf.mxu0
    %212 = vmatprep.mubr.bf16.mxu0 0
    %213 = vmatmul.mubr.bf16.gmra.mxu0 %v108
    %v214 = vpop.f32.mrf.mxu0
    %v215 = vadd.f32 %v83, %v214
    %v216 = vpop.f32.mrf.mxu0
    %v217 = vpop.f32.mrf.mxu0
    %v218 = vadd.f32 %v83, %v217
    %v219 = vpop.f32.mrf.mxu0
    %220 = vmatprep.mubr.bf16.mxu0 0
    %221 = vmatmul.mubr.bf16.gmra.mxu0 %v111
    %v222 = vpop.f32.mrf.mxu0
    %v223 = vadd.f32 %v83, %v222
    %v224 = vpop.f32.mrf.mxu0
    %v225 = vpop.f32.mrf.mxu0
    %v226 = vadd.f32 %v83, %v225
    %v227 = vpop.f32.mrf.mxu0
    %228 = vmatprep.mubr.bf16.mxu0 0
    %229 = vmatmul.mubr.bf16.gmra.mxu0 %v114
    %v230 = vpop.f32.mrf.mxu0
    %v231 = vadd.f32 %v83, %v230
    %v232 = vpop.f32.mrf.mxu0
    %v233 = vpop.f32.mrf.mxu0
    %v234 = vadd.f32 %v83, %v233
    %v235 = vpop.f32.mrf.mxu0
    %236 = vmatprep.mubr.bf16.mxu0 0
    %237 = vmatmul.mubr.bf16.gmra.mxu0 %v117
    %v238 = vpop.f32.mrf.mxu0
    %v239 = vadd.f32 %v83, %v238
    %v240 = vpop.f32.mrf.mxu0
    %v241 = vpop.f32.mrf.mxu0
    %v242 = vadd.f32 %v83, %v241
    %v243 = vpop.f32.mrf.mxu0
    %244 = vmatprep.mubr.bf16.mxu0 0
    %245 = vmatmul.mubr.bf16.gmra.mxu0 %v120
    %v246 = vpop.f32.mrf.mxu0
    %v247 = vadd.f32 %v83, %v246
    %v248 = vpop.f32.mrf.mxu0
    %v249 = vpop.f32.mrf.mxu0
    %v250 = vadd.f32 %v83, %v249
    %v251 = vpop.f32.mrf.mxu0
    %252 = vmatprep.mubr.bf16.mxu0 0
    %253 = vmatmul.mubr.bf16.gmra.mxu0 %v123
    %v254 = vpop.f32.mrf.mxu0
    %v255 = vadd.f32 %v83, %v254
    %v256 = vpop.f32.mrf.mxu0
    %v257 = vpop.f32.mrf.mxu0
    %v258 = vadd.f32 %v83, %v257
    %v259 = vpop.f32.mrf.mxu0
    %260 = vmatprep.mubr.bf16.mxu0 0
    %261 = vmatmul.mubr.bf16.gmra.mxu0 %v126
    %v262 = vpop.f32.mrf.mxu0
    %v263 = vadd.f32 %v83, %v262
    %v264 = vpop.f32.mrf.mxu0
    %v265 = vpop.f32.mrf.mxu0
    %v266 = vadd.f32 %v83, %v265
    %v267 = vpop.f32.mrf.mxu0
    %268 = vmatprep.mubr.bf16.mxu0 0
    %269 = vmatmul.mubr.bf16.gmra.mxu0 %v129
    %v270 = vpop.f32.mrf.mxu0
    %v271 = vadd.f32 %v83, %v270
    %v272 = vpop.f32.mrf.mxu0
    %v273 = vpop.f32.mrf.mxu0
    %v274 = vadd.f32 %v83, %v273
    %v275 = vpop.f32.mrf.mxu0
    %276 = vmatprep.mubr.bf16.mxu0 0
    %277 = vmatmul.mubr.bf16.gmra.mxu0 %v132
    %v278 = vpop.f32.mrf.mxu0
    %v279 = vadd.f32 %v83, %v278
    %v280 = vpop.f32.mrf.mxu0
    %v281 = vpop.f32.mrf.mxu0
    %v282 = vadd.f32 %v83, %v281
    %v283 = vpop.f32.mrf.mxu0
    %284 = vmatprep.mubr.bf16.mxu0 0
    %285 = vmatmul.mubr.bf16.gmra.mxu0 %v135
    %v286 = vpop.f32.mrf.mxu0
    %v287 = vadd.f32 %v83, %v286
    %v288 = vpop.f32.mrf.mxu0
    %v289 = vpop.f32.mrf.mxu0
    %v290 = vadd.f32 %v83, %v289
    %v291 = vpop.f32.mrf.mxu0
    %292 = vmatprep.mubr.bf16.mxu0 0
    %293 = vmatmul.mubr.bf16.gmra.mxu0 %v138
    %v294 = vpop.f32.mrf.mxu0
    %v295 = vadd.f32 %v83, %v294
    %v296 = vpop.f32.mrf.mxu0
    %v297 = vpop.f32.mrf.mxu0
    %v298 = vadd.f32 %v83, %v297
    %v299 = vpop.f32.mrf.mxu0
    %300 = vdwg.mxu0
    %v301 = vtanh.pop %v175
    %v302 = vtanh.pop %v178
    %v303 = vtanh.pop %v183
    %v304 = vtanh.pop %v186
    %v305 = vtanh.pop %v191
    %v306 = vtanh.pop %v194
    %v307 = vtanh.pop %v199
    %v308 = vtanh.pop %v202
    %v309 = vtanh.pop %v207
    %v310 = vtanh.pop %v210
    %v311 = vtanh.pop %v215
    %v312 = vtanh.pop %v218
    %v313 = vtanh.pop %v223
    %v314 = vtanh.pop %v226
    %v315 = vtanh.pop %v231
    %v316 = vtanh.pop %v234
    %v317 = vtanh.pop %v239
    %v318 = vtanh.pop %v242
    %v319 = vtanh.pop %v247
    %v320 = vtanh.pop %v250
    %v321 = vtanh.pop %v255
    %v322 = vtanh.pop %v258
    %v323 = vtanh.pop %v263
    %v324 = vtanh.pop %v266
    %v325 = vtanh.pop %v271
    %v326 = vtanh.pop %v274
    %v327 = vtanh.pop %v279
    %v328 = vtanh.pop %v282
    %v329 = vtanh.pop %v287
    %v330 = vtanh.pop %v290
    %v331 = vtanh.pop %v295
    %v332 = vtanh.pop %v298
    %v333 = vpack.c.bf16 %v302, %v301
    %v334 = vpack.c.bf16 %v304, %v303
    %v335 = vpack.c.bf16 %v306, %v305
    %v336 = vpack.c.bf16 %v308, %v307
    %v337 = vpack.c.bf16 %v310, %v309
    %v338 = vpack.c.bf16 %v312, %v311
    %v339 = vpack.c.bf16 %v314, %v313
    %v340 = vpack.c.bf16 %v316, %v315
    %v341 = vpack.c.bf16 %v318, %v317
    %v342 = vpack.c.bf16 %v320, %v319
    %v343 = vpack.c.bf16 %v322, %v321
    %v344 = vpack.c.bf16 %v324, %v323
    %v345 = vpack.c.bf16 %v326, %v325
    %v346 = vpack.c.bf16 %v328, %v327
    %v347 = vpack.c.bf16 %v330, %v329
    %v348 = vpack.c.bf16 %v332, %v331
    %v349 = vld [vmem:[%s3] sm:$0xf]
    %v350 = vld [vmem:[%s3 + $0x4] sm:$0xf]
    %v351 = vld [vmem:[%s3 + $0x8] sm:$0xf]
    %v352 = vld [vmem:[%s3 + $0xc] sm:$0xf]
    %v353 = vld [vmem:[%s4] sm:$0x1]
    %v355 = vlaneseq
    %v356 = vshrl.u32 %v355, 7
    %v357 = vsub.s32 0, %v356
    %v358 = vrot.slane %v353, %v357
    %v364 = vunpack.c.l.b16 %v349
    %v365 = vunpack.c.l.b16 %v350
    %v366 = vunpack.c.l.b16 %v351
    %v367 = vunpack.c.l.b16 %v352
    %v368 = vpack.c.b16 %v365, %v364
    %v369 = vpack.c.b16 %v367, %v366
    %vm372 = vcmask 261120
    %v374 = vsel %vm372, %v333, 0
    %v377 = vsel %vm372, %v334, 0
    %v380 = vsel %vm372, %v335, 0
    %v383 = vsel %vm372, %v336, 0
    %v386 = vsel %vm372, %v337, 0
    %v389 = vsel %vm372, %v338, 0
    %v392 = vsel %vm372, %v339, 0
    %v395 = vsel %vm372, %v340, 0
    %v398 = vsel %vm372, %v341, 0
    %v401 = vsel %vm372, %v342, 0
    %v404 = vsel %vm372, %v343, 0
    %v407 = vsel %vm372, %v344, 0
    %v410 = vsel %vm372, %v345, 0
    %v413 = vsel %vm372, %v346, 0
    %v416 = vsel %vm372, %v347, 0
    %v419 = vsel %vm372, %v348, 0
    %421 = vmatprep.subr.bf16.mxu0 0
    %422 = vmatpush1.bf16.msra.mxu0 0
    %423 = vmatprep.subr.bf16.mxu0 0
    %424 = vmatpush1.bf16.msra.mxu0 0
    %425 = vmatprep.subr.bf16.mxu0 0
    %426 = vmatpush1.bf16.msra.mxu0 0
    %427 = vmatprep.subr.bf16.mxu0 0
    %428 = vmatpush1.bf16.msra.mxu0 0
    %429 = vmatprep.subr.bf16.mxu0 0
    %430 = vmatpush1.bf16.msra.mxu0 0
    %431 = vmatprep.subr.bf16.mxu0 0
    %432 = vmatpush1.bf16.msra.mxu0 0
    %433 = vmatprep.subr.bf16.mxu0 0
    %434 = vmatpush1.bf16.msra.mxu0 %v369
    %435 = vmatprep.subr.bf16.mxu0 0
    %436 = vmatpush1.bf16.msra.mxu0 %v368
    %437 = vmatprep.subr.bf16.mxu0 0
    %438 = vmatpush2.bf16.msra.mxu0 0
    %439 = vmatprep.subr.bf16.mxu0 0
    %440 = vmatpush2.bf16.msra.mxu0 0
    %441 = vmatprep.subr.bf16.mxu0 0
    %442 = vmatpush2.bf16.msra.mxu0 0
    %443 = vmatprep.subr.bf16.mxu0 0
    %444 = vmatpush2.bf16.msra.mxu0 0
    %445 = vmatprep.subr.bf16.mxu0 0
    %446 = vmatpush2.bf16.msra.mxu0 0
    %447 = vmatprep.subr.bf16.mxu0 0
    %448 = vmatpush2.bf16.msra.mxu0 0
    %449 = vmatprep.subr.bf16.mxu0 0
    %450 = vmatpush2.bf16.msra.mxu0 0
    %451 = vmatprep.subr.bf16.mxu0 0
    %452 = vmatpush2.bf16.msra.mxu0 0
    %453 = vmatprep.mubr.bf16.mxu0 0
    %454 = vmatmul.mubr.bf16.gmra.mxu0 %v374
    %v455 = vpop.f32.mrf.mxu0
    %v456 = vadd.f32 %v358, %v455
    %v457 = vpop.f32.mrf.mxu0
    %v458 = vpop.f32.mrf.mxu0
    %v459 = vadd.f32 %v358, %v458
    %v460 = vpop.f32.mrf.mxu0
    %461 = vmatprep.mubr.bf16.mxu0 0
    %462 = vmatmul.mubr.bf16.gmra.mxu0 %v377
    %v463 = vpop.f32.mrf.mxu0
    %v464 = vadd.f32 %v358, %v463
    %v465 = vpop.f32.mrf.mxu0
    %v466 = vpop.f32.mrf.mxu0
    %v467 = vadd.f32 %v358, %v466
    %v468 = vpop.f32.mrf.mxu0
    %469 = vmatprep.mubr.bf16.mxu0 0
    %470 = vmatmul.mubr.bf16.gmra.mxu0 %v380
    %v471 = vpop.f32.mrf.mxu0
    %v472 = vadd.f32 %v358, %v471
    %v473 = vpop.f32.mrf.mxu0
    %v474 = vpop.f32.mrf.mxu0
    %v475 = vadd.f32 %v358, %v474
    %v476 = vpop.f32.mrf.mxu0
    %477 = vmatprep.mubr.bf16.mxu0 0
    %478 = vmatmul.mubr.bf16.gmra.mxu0 %v383
    %v479 = vpop.f32.mrf.mxu0
    %v480 = vadd.f32 %v358, %v479
    %v481 = vpop.f32.mrf.mxu0
    %v482 = vpop.f32.mrf.mxu0
    %v483 = vadd.f32 %v358, %v482
    %v484 = vpop.f32.mrf.mxu0
    %485 = vmatprep.mubr.bf16.mxu0 0
    %486 = vmatmul.mubr.bf16.gmra.mxu0 %v386
    %v487 = vpop.f32.mrf.mxu0
    %v488 = vadd.f32 %v358, %v487
    %v489 = vpop.f32.mrf.mxu0
    %v490 = vpop.f32.mrf.mxu0
    %v491 = vadd.f32 %v358, %v490
    %v492 = vpop.f32.mrf.mxu0
    %493 = vmatprep.mubr.bf16.mxu0 0
    %494 = vmatmul.mubr.bf16.gmra.mxu0 %v389
    %v495 = vpop.f32.mrf.mxu0
    %v496 = vadd.f32 %v358, %v495
    %v497 = vpop.f32.mrf.mxu0
    %v498 = vpop.f32.mrf.mxu0
    %v499 = vadd.f32 %v358, %v498
    %v500 = vpop.f32.mrf.mxu0
    %501 = vmatprep.mubr.bf16.mxu0 0
    %502 = vmatmul.mubr.bf16.gmra.mxu0 %v392
    %v503 = vpop.f32.mrf.mxu0
    %v504 = vadd.f32 %v358, %v503
    %v505 = vpop.f32.mrf.mxu0
    %v506 = vpop.f32.mrf.mxu0
    %v507 = vadd.f32 %v358, %v506
    %v508 = vpop.f32.mrf.mxu0
    %509 = vmatprep.mubr.bf16.mxu0 0
    %510 = vmatmul.mubr.bf16.gmra.mxu0 %v395
    %v511 = vpop.f32.mrf.mxu0
    %v512 = vadd.f32 %v358, %v511
    %v513 = vpop.f32.mrf.mxu0
    %v514 = vpop.f32.mrf.mxu0
    %v515 = vadd.f32 %v358, %v514
    %v516 = vpop.f32.mrf.mxu0
    %517 = vmatprep.mubr.bf16.mxu0 0
    %518 = vmatmul.mubr.bf16.gmra.mxu0 %v398
    %v519 = vpop.f32.mrf.mxu0
    %v520 = vadd.f32 %v358, %v519
    %v521 = vpop.f32.mrf.mxu0
    %v522 = vpop.f32.mrf.mxu0
    %v523 = vadd.f32 %v358, %v522
    %v524 = vpop.f32.mrf.mxu0
    %525 = vmatprep.mubr.bf16.mxu0 0
    %526 = vmatmul.mubr.bf16.gmra.mxu0 %v401
    %v527 = vpop.f32.mrf.mxu0
    %v528 = vadd.f32 %v358, %v527
    %v529 = vpop.f32.mrf.mxu0
    %v530 = vpop.f32.mrf.mxu0
    %v531 = vadd.f32 %v358, %v530
    %v532 = vpop.f32.mrf.mxu0
    %533 = vmatprep.mubr.bf16.mxu0 0
    %534 = vmatmul.mubr.bf16.gmra.mxu0 %v404
    %v535 = vpop.f32.mrf.mxu0
    %v536 = vadd.f32 %v358, %v535
    %v537 = vpop.f32.mrf.mxu0
    %v538 = vpop.f32.mrf.mxu0
    %v539 = vadd.f32 %v358, %v538
    %v540 = vpop.f32.mrf.mxu0
    %541 = vmatprep.mubr.bf16.mxu0 0
    %542 = vmatmul.mubr.bf16.gmra.mxu0 %v407
    %v543 = vpop.f32.mrf.mxu0
    %v544 = vadd.f32 %v358, %v543
    %v545 = vpop.f32.mrf.mxu0
    %v546 = vpop.f32.mrf.mxu0
    %v547 = vadd.f32 %v358, %v546
    %v548 = vpop.f32.mrf.mxu0
    %549 = vmatprep.mubr.bf16.mxu0 0
    %550 = vmatmul.mubr.bf16.gmra.mxu0 %v410
    %v551 = vpop.f32.mrf.mxu0
    %v552 = vadd.f32 %v358, %v551
    %v553 = vpop.f32.mrf.mxu0
    %v554 = vpop.f32.mrf.mxu0
    %v555 = vadd.f32 %v358, %v554
    %v556 = vpop.f32.mrf.mxu0
    %557 = vmatprep.mubr.bf16.mxu0 0
    %558 = vmatmul.mubr.bf16.gmra.mxu0 %v413
    %v559 = vpop.f32.mrf.mxu0
    %v560 = vadd.f32 %v358, %v559
    %v561 = vpop.f32.mrf.mxu0
    %v562 = vpop.f32.mrf.mxu0
    %v563 = vadd.f32 %v358, %v562
    %v564 = vpop.f32.mrf.mxu0
    %565 = vmatprep.mubr.bf16.mxu0 0
    %566 = vmatmul.mubr.bf16.gmra.mxu0 %v416
    %v567 = vpop.f32.mrf.mxu0
    %v568 = vadd.f32 %v358, %v567
    %v569 = vpop.f32.mrf.mxu0
    %v570 = vpop.f32.mrf.mxu0
    %v571 = vadd.f32 %v358, %v570
    %v572 = vpop.f32.mrf.mxu0
    %573 = vmatprep.mubr.bf16.mxu0 0
    %574 = vmatmul.mubr.bf16.gmra.mxu0 %v419
    %v575 = vpop.f32.mrf.mxu0
    %v576 = vadd.f32 %v358, %v575
    %v577 = vpop.f32.mrf.mxu0
    %v578 = vpop.f32.mrf.mxu0
    %v579 = vadd.f32 %v358, %v578
    %v580 = vpop.f32.mrf.mxu0
    %581 = vdwg.mxu0
    %v582 = vtanh.pop %v456
    %v583 = vtanh.pop %v459
    %v584 = vtanh.pop %v464
    %v585 = vtanh.pop %v467
    %v586 = vtanh.pop %v472
    %v587 = vtanh.pop %v475
    %v588 = vtanh.pop %v480
    %v589 = vtanh.pop %v483
    %v590 = vtanh.pop %v488
    %v591 = vtanh.pop %v491
    %v592 = vtanh.pop %v496
    %v593 = vtanh.pop %v499
    %v594 = vtanh.pop %v504
    %v595 = vtanh.pop %v507
    %v596 = vtanh.pop %v512
    %v597 = vtanh.pop %v515
    %v598 = vtanh.pop %v520
    %v599 = vtanh.pop %v523
    %v600 = vtanh.pop %v528
    %v601 = vtanh.pop %v531
    %v602 = vtanh.pop %v536
    %v603 = vtanh.pop %v539
    %v604 = vtanh.pop %v544
    %v605 = vtanh.pop %v547
    %v606 = vtanh.pop %v552
    %v607 = vtanh.pop %v555
    %v608 = vtanh.pop %v560
    %v609 = vtanh.pop %v563
    %v610 = vtanh.pop %v568
    %v611 = vtanh.pop %v571
    %v612 = vtanh.pop %v576
    %v613 = vtanh.pop %v579
    %v614 = vpack.c.bf16 %v583, %v582
    %v615 = vpack.c.bf16 %v585, %v584
    %v616 = vpack.c.bf16 %v587, %v586
    %v617 = vpack.c.bf16 %v589, %v588
    %v618 = vpack.c.bf16 %v591, %v590
    %v619 = vpack.c.bf16 %v593, %v592
    %v620 = vpack.c.bf16 %v595, %v594
    %v621 = vpack.c.bf16 %v597, %v596
    %v622 = vpack.c.bf16 %v599, %v598
    %v623 = vpack.c.bf16 %v601, %v600
    %v624 = vpack.c.bf16 %v603, %v602
    %v625 = vpack.c.bf16 %v605, %v604
    %v626 = vpack.c.bf16 %v607, %v606
    %v627 = vpack.c.bf16 %v609, %v608
    %v628 = vpack.c.bf16 %v611, %v610
    %v629 = vpack.c.bf16 %v613, %v612
    %v630 = vld [vmem:[%s5] sm:$0xf]
    %v631 = vld [vmem:[%s5 + $0x4] sm:$0xf]
    %v632 = vld [vmem:[%s5 + $0x8] sm:$0xf]
    %v633 = vld [vmem:[%s5 + $0xc] sm:$0xf]
    %v634 = vld [vmem:[%s6] sm:$0x1]
    %v636 = vlaneseq
    %v637 = vshrl.u32 %v636, 7
    %v638 = vsub.s32 0, %v637
    %v639 = vrot.slane %v634, %v638
    %v645 = vunpack.c.l.b16 %v630
    %v646 = vunpack.c.l.b16 %v631
    %v647 = vunpack.c.l.b16 %v632
    %v648 = vunpack.c.l.b16 %v633
    %v649 = vpack.c.b16 %v646, %v645
    %v650 = vpack.c.b16 %v648, %v647
    %v654 = vsel %vm372, %v614, 0
    %v657 = vsel %vm372, %v615, 0
    %v660 = vsel %vm372, %v616, 0
    %v663 = vsel %vm372, %v617, 0
    %v666 = vsel %vm372, %v618, 0
    %v669 = vsel %vm372, %v619, 0
    %v672 = vsel %vm372, %v620, 0
    %v675 = vsel %vm372, %v621, 0
    %v678 = vsel %vm372, %v622, 0
    %v681 = vsel %vm372, %v623, 0
    %v684 = vsel %vm372, %v624, 0
    %v687 = vsel %vm372, %v625, 0
    %v690 = vsel %vm372, %v626, 0
    %v693 = vsel %vm372, %v627, 0
    %v696 = vsel %vm372, %v628, 0
    %v699 = vsel %vm372, %v629, 0
    %701 = vmatprep.subr.bf16.mxu0 0
    %702 = vmatpush1.bf16.msra.mxu0 0
    %703 = vmatprep.subr.bf16.mxu0 0
    %704 = vmatpush1.bf16.msra.mxu0 0
    %705 = vmatprep.subr.bf16.mxu0 0
    %706 = vmatpush1.bf16.msra.mxu0 0
    %707 = vmatprep.subr.bf16.mxu0 0
    %708 = vmatpush1.bf16.msra.mxu0 0
    %709 = vmatprep.subr.bf16.mxu0 0
    %710 = vmatpush1.bf16.msra.mxu0 0
    %711 = vmatprep.subr.bf16.mxu0 0
    %712 = vmatpush1.bf16.msra.mxu0 0
    %713 = vmatprep.subr.bf16.mxu0 0
    %714 = vmatpush1.bf16.msra.mxu0 %v650
    %715 = vmatprep.subr.bf16.mxu0 0
    %716 = vmatpush1.bf16.msra.mxu0 %v649
    %717 = vmatprep.subr.bf16.mxu0 0
    %718 = vmatpush2.bf16.msra.mxu0 0
    %719 = vmatprep.subr.bf16.mxu0 0
    %720 = vmatpush2.bf16.msra.mxu0 0
    %721 = vmatprep.subr.bf16.mxu0 0
    %722 = vmatpush2.bf16.msra.mxu0 0
    %723 = vmatprep.subr.bf16.mxu0 0
    %724 = vmatpush2.bf16.msra.mxu0 0
    %725 = vmatprep.subr.bf16.mxu0 0
    %726 = vmatpush2.bf16.msra.mxu0 0
    %727 = vmatprep.subr.bf16.mxu0 0
    %728 = vmatpush2.bf16.msra.mxu0 0
    %729 = vmatprep.subr.bf16.mxu0 0
    %730 = vmatpush2.bf16.msra.mxu0 0
    %731 = vmatprep.subr.bf16.mxu0 0
    %732 = vmatpush2.bf16.msra.mxu0 0
    %733 = vmatprep.mubr.bf16.mxu0 0
    %734 = vmatmul.mubr.bf16.gmra.mxu0 %v654
    %v735 = vpop.f32.mrf.mxu0
    %v736 = vadd.f32 %v639, %v735
    %v737 = vpop.f32.mrf.mxu0
    %v738 = vpop.f32.mrf.mxu0
    %v739 = vadd.f32 %v639, %v738
    %v740 = vpop.f32.mrf.mxu0
    %741 = vmatprep.mubr.bf16.mxu0 0
    %742 = vmatmul.mubr.bf16.gmra.mxu0 %v657
    %v743 = vpop.f32.mrf.mxu0
    %v744 = vadd.f32 %v639, %v743
    %v745 = vpop.f32.mrf.mxu0
    %v746 = vpop.f32.mrf.mxu0
    %v747 = vadd.f32 %v639, %v746
    %v748 = vpop.f32.mrf.mxu0
    %749 = vmatprep.mubr.bf16.mxu0 0
    %750 = vmatmul.mubr.bf16.gmra.mxu0 %v660
    %v751 = vpop.f32.mrf.mxu0
    %v752 = vadd.f32 %v639, %v751
    %v753 = vpop.f32.mrf.mxu0
    %v754 = vpop.f32.mrf.mxu0
    %v755 = vadd.f32 %v639, %v754
    %v756 = vpop.f32.mrf.mxu0
    %757 = vmatprep.mubr.bf16.mxu0 0
    %758 = vmatmul.mubr.bf16.gmra.mxu0 %v663
    %v759 = vpop.f32.mrf.mxu0
    %v760 = vadd.f32 %v639, %v759
    %v761 = vpop.f32.mrf.mxu0
    %v762 = vpop.f32.mrf.mxu0
    %v763 = vadd.f32 %v639, %v762
    %v764 = vpop.f32.mrf.mxu0
    %765 = vmatprep.mubr.bf16.mxu0 0
    %766 = vmatmul.mubr.bf16.gmra.mxu0 %v666
    %v767 = vpop.f32.mrf.mxu0
    %v768 = vadd.f32 %v639, %v767
    %v769 = vpop.f32.mrf.mxu0
    %v770 = vpop.f32.mrf.mxu0
    %v771 = vadd.f32 %v639, %v770
    %v772 = vpop.f32.mrf.mxu0
    %773 = vmatprep.mubr.bf16.mxu0 0
    %774 = vmatmul.mubr.bf16.gmra.mxu0 %v669
    %v775 = vpop.f32.mrf.mxu0
    %v776 = vadd.f32 %v639, %v775
    %v777 = vpop.f32.mrf.mxu0
    %v778 = vpop.f32.mrf.mxu0
    %v779 = vadd.f32 %v639, %v778
    %v780 = vpop.f32.mrf.mxu0
    %781 = vmatprep.mubr.bf16.mxu0 0
    %782 = vmatmul.mubr.bf16.gmra.mxu0 %v672
    %v783 = vpop.f32.mrf.mxu0
    %v784 = vadd.f32 %v639, %v783
    %v785 = vpop.f32.mrf.mxu0
    %v786 = vpop.f32.mrf.mxu0
    %v787 = vadd.f32 %v639, %v786
    %v788 = vpop.f32.mrf.mxu0
    %789 = vmatprep.mubr.bf16.mxu0 0
    %790 = vmatmul.mubr.bf16.gmra.mxu0 %v675
    %v791 = vpop.f32.mrf.mxu0
    %v792 = vadd.f32 %v639, %v791
    %v793 = vpop.f32.mrf.mxu0
    %v794 = vpop.f32.mrf.mxu0
    %v795 = vadd.f32 %v639, %v794
    %v796 = vpop.f32.mrf.mxu0
    %797 = vmatprep.mubr.bf16.mxu0 0
    %798 = vmatmul.mubr.bf16.gmra.mxu0 %v678
    %v799 = vpop.f32.mrf.mxu0
    %v800 = vadd.f32 %v639, %v799
    %v801 = vpop.f32.mrf.mxu0
    %v802 = vpop.f32.mrf.mxu0
    %v803 = vadd.f32 %v639, %v802
    %v804 = vpop.f32.mrf.mxu0
    %805 = vmatprep.mubr.bf16.mxu0 0
    %806 = vmatmul.mubr.bf16.gmra.mxu0 %v681
    %v807 = vpop.f32.mrf.mxu0
    %v808 = vadd.f32 %v639, %v807
    %v809 = vpop.f32.mrf.mxu0
    %v810 = vpop.f32.mrf.mxu0
    %v811 = vadd.f32 %v639, %v810
    %v812 = vpop.f32.mrf.mxu0
    %813 = vmatprep.mubr.bf16.mxu0 0
    %814 = vmatmul.mubr.bf16.gmra.mxu0 %v684
    %v815 = vpop.f32.mrf.mxu0
    %v816 = vadd.f32 %v639, %v815
    %v817 = vpop.f32.mrf.mxu0
    %v818 = vpop.f32.mrf.mxu0
    %v819 = vadd.f32 %v639, %v818
    %v820 = vpop.f32.mrf.mxu0
    %821 = vmatprep.mubr.bf16.mxu0 0
    %822 = vmatmul.mubr.bf16.gmra.mxu0 %v687
    %v823 = vpop.f32.mrf.mxu0
    %v824 = vadd.f32 %v639, %v823
    %v825 = vpop.f32.mrf.mxu0
    %v826 = vpop.f32.mrf.mxu0
    %v827 = vadd.f32 %v639, %v826
    %v828 = vpop.f32.mrf.mxu0
    %829 = vmatprep.mubr.bf16.mxu0 0
    %830 = vmatmul.mubr.bf16.gmra.mxu0 %v690
    %v831 = vpop.f32.mrf.mxu0
    %v832 = vadd.f32 %v639, %v831
    %v833 = vpop.f32.mrf.mxu0
    %v834 = vpop.f32.mrf.mxu0
    %v835 = vadd.f32 %v639, %v834
    %v836 = vpop.f32.mrf.mxu0
    %837 = vmatprep.mubr.bf16.mxu0 0
    %838 = vmatmul.mubr.bf16.gmra.mxu0 %v693
    %v839 = vpop.f32.mrf.mxu0
    %v840 = vadd.f32 %v639, %v839
    %v841 = vpop.f32.mrf.mxu0
    %v842 = vpop.f32.mrf.mxu0
    %v843 = vadd.f32 %v639, %v842
    %v844 = vpop.f32.mrf.mxu0
    %845 = vmatprep.mubr.bf16.mxu0 0
    %846 = vmatmul.mubr.bf16.gmra.mxu0 %v696
    %v847 = vpop.f32.mrf.mxu0
    %v848 = vadd.f32 %v639, %v847
    %v849 = vpop.f32.mrf.mxu0
    %v850 = vpop.f32.mrf.mxu0
    %v851 = vadd.f32 %v639, %v850
    %v852 = vpop.f32.mrf.mxu0
    %853 = vmatprep.mubr.bf16.mxu0 0
    %854 = vmatmul.mubr.bf16.gmra.mxu0 %v699
    %v855 = vpop.f32.mrf.mxu0
    %v856 = vadd.f32 %v639, %v855
    %v857 = vpop.f32.mrf.mxu0
    %v858 = vpop.f32.mrf.mxu0
    %v859 = vadd.f32 %v639, %v858
    %v860 = vpop.f32.mrf.mxu0
    %861 = vdwg.mxu0
    %862 = vst [vmem:[#allocation2] sm:$0xff] %v736
    %863 = vst [vmem:[#allocation2 + $0x8] sm:$0xff] %v739
    %864 = vst [vmem:[#allocation2 + $0x10] sm:$0xff] %v744
    %865 = vst [vmem:[#allocation2 + $0x18] sm:$0xff] %v747
    %866 = vst [vmem:[#allocation2 + $0x20] sm:$0xff] %v752
    %867 = vst [vmem:[#allocation2 + $0x28] sm:$0xff] %v755
    %868 = vst [vmem:[#allocation2 + $0x30] sm:$0xff] %v760
    %869 = vst [vmem:[#allocation2 + $0x38] sm:$0xff] %v763
    %870 = vst [vmem:[#allocation2 + $0x40] sm:$0xff] %v768
    %871 = vst [vmem:[#allocation2 + $0x48] sm:$0xff] %v771
    %872 = vst [vmem:[#allocation2 + $0x50] sm:$0xff] %v776
    %873 = vst [vmem:[#allocation2 + $0x58] sm:$0xff] %v779
    %874 = vst [vmem:[#allocation2 + $0x60] sm:$0xff] %v784
    %875 = vst [vmem:[#allocation2 + $0x68] sm:$0xff] %v787
    %876 = vst [vmem:[#allocation2 + $0x70] sm:$0xff] %v792
    %877 = vst [vmem:[#allocation2 + $0x78] sm:$0xff] %v795
    %878 = vst [vmem:[#allocation2 + $0x80] sm:$0xff] %v800
    %879 = vst [vmem:[#allocation2 + $0x88] sm:$0xff] %v803
    %880 = vst [vmem:[#allocation2 + $0x90] sm:$0xff] %v808
    %881 = vst [vmem:[#allocation2 + $0x98] sm:$0xff] %v811
    %882 = vst [vmem:[#allocation2 + $0xa0] sm:$0xff] %v816
    %883 = vst [vmem:[#allocation2 + $0xa8] sm:$0xff] %v819
    %884 = vst [vmem:[#allocation2 + $0xb0] sm:$0xff] %v824
    %885 = vst [vmem:[#allocation2 + $0xb8] sm:$0xff] %v827
    %886 = vst [vmem:[#allocation2 + $0xc0] sm:$0xff] %v832
    %887 = vst [vmem:[#allocation2 + $0xc8] sm:$0xff] %v835
    %888 = vst [vmem:[#allocation2 + $0xd0] sm:$0xff] %v840
    %889 = vst [vmem:[#allocation2 + $0xd8] sm:$0xff] %v843
    %890 = vst [vmem:[#allocation2 + $0xe0] sm:$0xff] %v848
    %891 = vst [vmem:[#allocation2 + $0xe8] sm:$0xff] %v851
    %892 = vst [vmem:[#allocation2 + $0xf0] sm:$0xff] %v856
    %893 = vst [vmem:[#allocation2 + $0xf8] sm:$0xff] %v859
    // Predicated region
    $region30: #{tpu_custom_call.1} parent=1 // pred_check
      _
    $region31: #{tpu_custom_call.1} parent=1 // pred_check_branch
      %895 = sbr.rel (0) target = $region33
    $region32: #{tpu_custom_call.1} parent=1 // pred_region
      %s897 = ssub.s32 4096, 4096
      %898 = vsyncadd [#allocation3], %s897
      %s899 = sshll.u32 [#allocation2], 4
      %s900 = int_to_ptr.vmem [resolvable:$true] %s899
      %905 = dma.vmem_to_hbm [thread:$0]  %s900, 4096, %s7, [#allocation3], 128, 128, 8
    $region33: #{tpu_custom_call.1} parent=1 // pred_fallthru
      _
    // Predicated region
    $region34: #{tpu_custom_call.1} parent=1 // pred_check
      _
    $region35: #{tpu_custom_call.1} parent=1 // pred_check_branch
      %907 = sbr.rel (0) target = $region37
    $region36: #{tpu_custom_call.1} parent=1 // pred_region
      %908 = dma.done [#allocation3], 4096
    $region37: #{tpu_custom_call.1} parent=1 // pred_fallthru
      _
    %909 = vsyncpa [#allocation3], 1

// kernel: tpu_custom_call.1
$region0: #{tpu_custom_call.1}
  #allocation0 [shape = 'u32[]', space=smem, size = 0x4, offset = 0x4, fixed_abs, tag = 'smem constant byte address 0x4 - core index']
  #allocation1 [shape = 'u32[144,128]{1,0:T(1,128)}', space=vmem, size = 0x12000, scoped, tag = 'internal scratch']
  %s0 = inlined_call_operand.vmem [shape: f32[256,16], index: 0, kind: input, shape index: {}]
  %s1 = inlined_call_operand.vmem [shape: bf16[16,32], index: 1, kind: input, shape index: {}]
  %s2 = inlined_call_operand.vmem [shape: f32[1,32], index: 2, kind: input, shape index: {}]
  %s3 = inlined_call_operand.vmem [shape: bf16[32,32], index: 3, kind: input, shape index: {}]
  %s4 = inlined_call_operand.vmem [shape: f32[1,32], index: 4, kind: input, shape index: {}]
  %s5 = inlined_call_operand.vmem [shape: bf16[32,128], index: 5, kind: input, shape index: {}]
  %s6 = inlined_call_operand.vmem [shape: f32[1,128], index: 6, kind: input, shape index: {}]
  %s7 = inlined_call_operand.hbm [shape: f32[256,128], index: 7, kind: output, shape index: {}]
  %s8 = sld [smem:[#allocation0]]
  $region38: #{tpu_custom_call.1} parent=0
    _
  %s10 = ssub.s32 1, %s8
  %s11 = scalar_select 0, %s10, %s8
  $region1: #{tpu_custom_call.1} parent=0
    #allocation2 [shape = 'u8[131072]{0}', space=vmem, size = 0x20000, scoped, tag = 'output window, operand 0, single buffered']
    #allocation3 [shape = 's32[1]{0}', space=sflag, size = 0x4, scoped, tag = 'scoped memory for tpu_custom_call.1']
    %12 = vsyncpa [#allocation3], 0
    // Predicated region
    $region2: #{tpu_custom_call.1} parent=1 // pred_check
      _
    $region3: #{tpu_custom_call.1} parent=1 // pred_check_branch
      %14 = sbr.rel (0) target = $region5
    $region4: #{tpu_custom_call.1} parent=1 // pred_region
      _
    $region5: #{tpu_custom_call.1} parent=1 // pred_fallthru
      _
    // Predicated region
    $region6: #{tpu_custom_call.1} parent=1 // pred_check
      _
    $region7: #{tpu_custom_call.1} parent=1 // pred_check_branch
      %16 = sbr.rel (0) target = $region9
    $region8: #{tpu_custom_call.1} parent=1 // pred_region
      _
    $region9: #{tpu_custom_call.1} parent=1 // pred_fallthru
      _
    // Predicated region
    $region10: #{tpu_custom_call.1} parent=1 // pred_check
      _
    $region11: #{tpu_custom_call.1} parent=1 // pred_check_branch
      %18 = sbr.rel (0) target = $region13
    $region12: #{tpu_custom_call.1} parent=1 // pred_region
      _
    $region13: #{tpu_custom_call.1} parent=1 // pred_fallthru
      _
    // Predicated region
    $region14: #{tpu_custom_call.1} parent=1 // pred_check
      _
    $region15: #{tpu_custom_call.1} parent=1 // pred_check_branch
      %20 = sbr.rel (0) target = $region17
    $region16: #{tpu_custom_call.1} parent=1 // pred_region
      _
    $region17: #{tpu_custom_call.1} parent=1 // pred_fallthru
      _
    // Predicated region
    $region18: #{tpu_custom_call.1} parent=1 // pred_check
      _
    $region19: #{tpu_custom_call.1} parent=1 // pred_check_branch
      %22 = sbr.rel (0) target = $region21
    $region20: #{tpu_custom_call.1} parent=1 // pred_region
      _
    $region21: #{tpu_custom_call.1} parent=1 // pred_fallthru
      _
    // Predicated region
    $region22: #{tpu_custom_call.1} parent=1 // pred_check
      _
    $region23: #{tpu_custom_call.1} parent=1 // pred_check_branch
      %24 = sbr.rel (0) target = $region25
    $region24: #{tpu_custom_call.1} parent=1 // pred_region
      _
    $region25: #{tpu_custom_call.1} parent=1 // pred_fallthru
      _
    // Predicated region
    $region26: #{tpu_custom_call.1} parent=1 // pred_check
      _
    $region27: #{tpu_custom_call.1} parent=1 // pred_check_branch
      %26 = sbr.rel (0) target = $region29
    $region28: #{tpu_custom_call.1} parent=1 // pred_region
      _
    $region29: #{tpu_custom_call.1} parent=1 // pred_fallthru
      _
    %v28 = vld [vmem:[%s0] sm:$0xff]
    %v29 = vld [vmem:[%s0 + $0x8] sm:$0xff]
    %v30 = vld [vmem:[%s0 + $0x10] sm:$0xff]
    %v31 = vld [vmem:[%s0 + $0x18] sm:$0xff]
    %v32 = vld [vmem:[%s0 + $0x20] sm:$0xff]
    %v33 = vld [vmem:[%s0 + $0x28] sm:$0xff]
    %v34 = vld [vmem:[%s0 + $0x30] sm:$0xff]
    %v35 = vld [vmem:[%s0 + $0x38] sm:$0xff]
    %v36 = vld [vmem:[%s0 + $0x40] sm:$0xff]
    %v37 = vld [vmem:[%s0 + $0x48] sm:$0xff]
    %v38 = vld [vmem:[%s0 + $0x50] sm:$0xff]
    %v39 = vld [vmem:[%s0 + $0x58] sm:$0xff]
    %v40 = vld [vmem:[%s0 + $0x60] sm:$0xff]
    %v41 = vld [vmem:[%s0 + $0x68] sm:$0xff]
    %v42 = vld [vmem:[%s0 + $0x70] sm:$0xff]
    %v43 = vld [vmem:[%s0 + $0x78] sm:$0xff]
    %v44 = vld [vmem:[%s0 + $0x80] sm:$0xff]
    %v45 = vld [vmem:[%s0 + $0x88] sm:$0xff]
    %v46 = vld [vmem:[%s0 + $0x90] sm:$0xff]
    %v47 = vld [vmem:[%s0 + $0x98] sm:$0xff]
    %v48 = vld [vmem:[%s0 + $0xa0] sm:$0xff]
    %v49 = vld [vmem:[%s0 + $0xa8] sm:$0xff]
    %v50 = vld [vmem:[%s0 + $0xb0] sm:$0xff]
    %v51 = vld [vmem:[%s0 + $0xb8] sm:$0xff]
    %v52 = vld [vmem:[%s0 + $0xc0] sm:$0xff]
    %v53 = vld [vmem:[%s0 + $0xc8] sm:$0xff]
    %v54 = vld [vmem:[%s0 + $0xd0] sm:$0xff]
    %v55 = vld [vmem:[%s0 + $0xd8] sm:$0xff]
    %v56 = vld [vmem:[%s0 + $0xe0] sm:$0xff]
    %v57 = vld [vmem:[%s0 + $0xe8] sm:$0xff]
    %v58 = vld [vmem:[%s0 + $0xf0] sm:$0xff]
    %v59 = vld [vmem:[%s0 + $0xf8] sm:$0xff]
    %v60 = vpack.c.bf16 %v29, %v28
    %v61 = vpack.c.bf16 %v31, %v30
    %v62 = vpack.c.bf16 %v33, %v32
    %v63 = vpack.c.bf16 %v35, %v34
    %v64 = vpack.c.bf16 %v37, %v36
    %v65 = vpack.c.bf16 %v39, %v38
    %v66 = vpack.c.bf16 %v41, %v40
    %v67 = vpack.c.bf16 %v43, %v42
    %v68 = vpack.c.bf16 %v45, %v44
    %v69 = vpack.c.bf16 %v47, %v46
    %v70 = vpack.c.bf16 %v49, %v48
    %v71 = vpack.c.bf16 %v51, %v50
    %v72 = vpack.c.bf16 %v53, %v52
    %v73 = vpack.c.bf16 %v55, %v54
    %v74 = vpack.c.bf16 %v57, %v56
    %v75 = vpack.c.bf16 %v59, %v58
    %v76 = vld [vmem:[%s1] sm:$0xf]
    %v77 = vld [vmem:[%s1 + $0x4] sm:$0xf]
    %v78 = vld [vmem:[%s2] sm:$0x1]
    %v80 = vlaneseq
    %v81 = vshrl.u32 %v80, 7
    %v82 = vsub.s32 0, %v81
    %v83 = vrot.slane %v78, %v82
    %v87 = vunpack.c.l.b16 %v76
    %v88 = vunpack.c.l.b16 %v77
    %v89 = vpack.c.b16 %v88, %v87
    %vm91 = vcmask 130048
    %v93 = vsel %vm91, %v60, 0
    %v96 = vsel %vm91, %v61, 0
    %v99 = vsel %vm91, %v62, 0
    %v102 = vsel %vm91, %v63, 0
    %v105 = vsel %vm91, %v64, 0
    %v108 = vsel %vm91, %v65, 0
    %v111 = vsel %vm91, %v66, 0
    %v114 = vsel %vm91, %v67, 0
    %v117 = vsel %vm91, %v68, 0
    %v120 = vsel %vm91, %v69, 0
    %v123 = vsel %vm91, %v70, 0
    %v126 = vsel %vm91, %v71, 0
    %v129 = vsel %vm91, %v72, 0
    %v132 = vsel %vm91, %v73, 0
    %v135 = vsel %vm91, %v74, 0
    %v138 = vsel %vm91, %v75, 0
    %140 = vmatprep.subr.bf16.mxu0 0
    %141 = vmatpush1.bf16.msra.mxu0 0
    %142 = vmatprep.subr.bf16.mxu0 0
    %143 = vmatpush1.bf16.msra.mxu0 0
    %144 = vmatprep.subr.bf16.mxu0 0
    %145 = vmatpush1.bf16.msra.mxu0 0
    %146 = vmatprep.subr.bf16.mxu0 0
    %147 = vmatpush1.bf16.msra.mxu0 0
    %148 = vmatprep.subr.bf16.mxu0 0
    %149 = vmatpush1.bf16.msra.mxu0 0
    %150 = vmatprep.subr.bf16.mxu0 0
    %151 = vmatpush1.bf16.msra.mxu0 0
    %152 = vmatprep.subr.bf16.mxu0 0
    %153 = vmatpush1.bf16.msra.mxu0 0
    %154 = vmatprep.subr.bf16.mxu0 0
    %155 = vmatpush1.bf16.msra.mxu0 %v89
    %156 = vmatprep.subr.bf16.mxu0 0
    %157 = vmatpush2.bf16.msra.mxu0 0
    %158 = vmatprep.subr.bf16.mxu0 0
    %159 = vmatpush2.bf16.msra.mxu0 0
    %160 = vmatprep.subr.bf16.mxu0 0
    %161 = vmatpush2.bf16.msra.mxu0 0
    %162 = vmatprep.subr.bf16.mxu0 0
    %163 = vmatpush2.bf16.msra.mxu0 0
    %164 = vmatprep.subr.bf16.mxu0 0
    %165 = vmatpush2.bf16.msra.mxu0 0
    %166 = vmatprep.subr.bf16.mxu0 0
    %167 = vmatpush2.bf16.msra.mxu0 0
    %168 = vmatprep.subr.bf16.mxu0 0
    %169 = vmatpush2.bf16.msra.mxu0 0
    %170 = vmatprep.subr.bf16.mxu0 0
    %171 = vmatpush2.bf16.msra.mxu0 0
    %172 = vmatprep.mubr.bf16.mxu0 0
    %173 = vmatmul.mubr.bf16.gmra.mxu0 %v93
    %v174 = vpop.f32.mrf.mxu0
    %v175 = vadd.f32 %v83, %v174
    %v176 = vpop.f32.mrf.mxu0
    %v177 = vpop.f32.mrf.mxu0
    %v178 = vadd.f32 %v83, %v177
    %v179 = vpop.f32.mrf.mxu0
    %180 = vmatprep.mubr.bf16.mxu0 0
    %181 = vmatmul.mubr.bf16.gmra.mxu0 %v96
    %v182 = vpop.f32.mrf.mxu0
    %v183 = vadd.f32 %v83, %v182
    %v184 = vpop.f32.mrf.mxu0
    %v185 = vpop.f32.mrf.mxu0
    %v186 = vadd.f32 %v83, %v185
    %v187 = vpop.f32.mrf.mxu0
    %188 = vmatprep.mubr.bf16.mxu0 0
    %189 = vmatmul.mubr.bf16.gmra.mxu0 %v99
    %v190 = vpop.f32.mrf.mxu0
    %v191 = vadd.f32 %v83, %v190
    %v192 = vpop.f32.mrf.mxu0
    %v193 = vpop.f32.mrf.mxu0
    %v194 = vadd.f32 %v83, %v193
    %v195 = vpop.f32.mrf.mxu0
    %196 = vmatprep.mubr.bf16.mxu0 0
    %197 = vmatmul.mubr.bf16.gmra.mxu0 %v102
    %v198 = vpop.f32.mrf.mxu0
    %v199 = vadd.f32 %v83, %v198
    %v200 = vpop.f32.mrf.mxu0
    %v201 = vpop.f32.mrf.mxu0
    %v202 = vadd.f32 %v83, %v201
    %v203 = vpop.f32.mrf.mxu0
    %204 = vmatprep.mubr.bf16.mxu0 0
    %205 = vmatmul.mubr.bf16.gmra.mxu0 %v105
    %v206 = vpop.f32.mrf.mxu0
    %v207 = vadd.f32 %v83, %v206
    %v208 = vpop.f32.mrf.mxu0
    %v209 = vpop.f32.mrf.mxu0
    %v210 = vadd.f32 %v83, %v209
    %v211 = vpop.f32.mrf.mxu0
    %212 = vmatprep.mubr.bf16.mxu0 0
    %213 = vmatmul.mubr.bf16.gmra.mxu0 %v108
    %v214 = vpop.f32.mrf.mxu0
    %v215 = vadd.f32 %v83, %v214
    %v216 = vpop.f32.mrf.mxu0
    %v217 = vpop.f32.mrf.mxu0
    %v218 = vadd.f32 %v83, %v217
    %v219 = vpop.f32.mrf.mxu0
    %220 = vmatprep.mubr.bf16.mxu0 0
    %221 = vmatmul.mubr.bf16.gmra.mxu0 %v111
    %v222 = vpop.f32.mrf.mxu0
    %v223 = vadd.f32 %v83, %v222
    %v224 = vpop.f32.mrf.mxu0
    %v225 = vpop.f32.mrf.mxu0
    %v226 = vadd.f32 %v83, %v225
    %v227 = vpop.f32.mrf.mxu0
    %228 = vmatprep.mubr.bf16.mxu0 0
    %229 = vmatmul.mubr.bf16.gmra.mxu0 %v114
    %v230 = vpop.f32.mrf.mxu0
    %v231 = vadd.f32 %v83, %v230
    %v232 = vpop.f32.mrf.mxu0
    %v233 = vpop.f32.mrf.mxu0
    %v234 = vadd.f32 %v83, %v233
    %v235 = vpop.f32.mrf.mxu0
    %236 = vmatprep.mubr.bf16.mxu0 0
    %237 = vmatmul.mubr.bf16.gmra.mxu0 %v117
    %v238 = vpop.f32.mrf.mxu0
    %v239 = vadd.f32 %v83, %v238
    %v240 = vpop.f32.mrf.mxu0
    %v241 = vpop.f32.mrf.mxu0
    %v242 = vadd.f32 %v83, %v241
    %v243 = vpop.f32.mrf.mxu0
    %244 = vmatprep.mubr.bf16.mxu0 0
    %245 = vmatmul.mubr.bf16.gmra.mxu0 %v120
    %v246 = vpop.f32.mrf.mxu0
    %v247 = vadd.f32 %v83, %v246
    %v248 = vpop.f32.mrf.mxu0
    %v249 = vpop.f32.mrf.mxu0
    %v250 = vadd.f32 %v83, %v249
    %v251 = vpop.f32.mrf.mxu0
    %252 = vmatprep.mubr.bf16.mxu0 0
    %253 = vmatmul.mubr.bf16.gmra.mxu0 %v123
    %v254 = vpop.f32.mrf.mxu0
    %v255 = vadd.f32 %v83, %v254
    %v256 = vpop.f32.mrf.mxu0
    %v257 = vpop.f32.mrf.mxu0
    %v258 = vadd.f32 %v83, %v257
    %v259 = vpop.f32.mrf.mxu0
    %260 = vmatprep.mubr.bf16.mxu0 0
    %261 = vmatmul.mubr.bf16.gmra.mxu0 %v126
    %v262 = vpop.f32.mrf.mxu0
    %v263 = vadd.f32 %v83, %v262
    %v264 = vpop.f32.mrf.mxu0
    %v265 = vpop.f32.mrf.mxu0
    %v266 = vadd.f32 %v83, %v265
    %v267 = vpop.f32.mrf.mxu0
    %268 = vmatprep.mubr.bf16.mxu0 0
    %269 = vmatmul.mubr.bf16.gmra.mxu0 %v129
    %v270 = vpop.f32.mrf.mxu0
    %v271 = vadd.f32 %v83, %v270
    %v272 = vpop.f32.mrf.mxu0
    %v273 = vpop.f32.mrf.mxu0
    %v274 = vadd.f32 %v83, %v273
    %v275 = vpop.f32.mrf.mxu0
    %276 = vmatprep.mubr.bf16.mxu0 0
    %277 = vmatmul.mubr.bf16.gmra.mxu0 %v132
    %v278 = vpop.f32.mrf.mxu0
    %v279 = vadd.f32 %v83, %v278
    %v280 = vpop.f32.mrf.mxu0
    %v281 = vpop.f32.mrf.mxu0
    %v282 = vadd.f32 %v83, %v281
    %v283 = vpop.f32.mrf.mxu0
    %284 = vmatprep.mubr.bf16.mxu0 0
    %285 = vmatmul.mubr.bf16.gmra.mxu0 %v135
    %v286 = vpop.f32.mrf.mxu0
    %v287 = vadd.f32 %v83, %v286
    %v288 = vpop.f32.mrf.mxu0
    %v289 = vpop.f32.mrf.mxu0
    %v290 = vadd.f32 %v83, %v289
    %v291 = vpop.f32.mrf.mxu0
    %292 = vmatprep.mubr.bf16.mxu0 0
    %293 = vmatmul.mubr.bf16.gmra.mxu0 %v138
    %v294 = vpop.f32.mrf.mxu0
    %v295 = vadd.f32 %v83, %v294
    %v296 = vpop.f32.mrf.mxu0
    %v297 = vpop.f32.mrf.mxu0
    %v298 = vadd.f32 %v83, %v297
    %v299 = vpop.f32.mrf.mxu0
    %300 = vdwg.mxu0
    %v301 = vtanh.pop %v175
    %v302 = vtanh.pop %v178
    %v303 = vtanh.pop %v183
    %v304 = vtanh.pop %v186
    %v305 = vtanh.pop %v191
    %v306 = vtanh.pop %v194
    %v307 = vtanh.pop %v199
    %v308 = vtanh.pop %v202
    %v309 = vtanh.pop %v207
    %v310 = vtanh.pop %v210
    %v311 = vtanh.pop %v215
    %v312 = vtanh.pop %v218
    %v313 = vtanh.pop %v223
    %v314 = vtanh.pop %v226
    %v315 = vtanh.pop %v231
    %v316 = vtanh.pop %v234
    %v317 = vtanh.pop %v239
    %v318 = vtanh.pop %v242
    %v319 = vtanh.pop %v247
    %v320 = vtanh.pop %v250
    %v321 = vtanh.pop %v255
    %v322 = vtanh.pop %v258
    %v323 = vtanh.pop %v263
    %v324 = vtanh.pop %v266
    %v325 = vtanh.pop %v271
    %v326 = vtanh.pop %v274
    %v327 = vtanh.pop %v279
    %v328 = vtanh.pop %v282
    %v329 = vtanh.pop %v287
    %v330 = vtanh.pop %v290
    %v331 = vtanh.pop %v295
    %v332 = vtanh.pop %v298
    %v333 = vpack.c.bf16 %v302, %v301
    %v334 = vpack.c.bf16 %v304, %v303
    %v335 = vpack.c.bf16 %v306, %v305
    %v336 = vpack.c.bf16 %v308, %v307
    %v337 = vpack.c.bf16 %v310, %v309
    %v338 = vpack.c.bf16 %v312, %v311
    %v339 = vpack.c.bf16 %v314, %v313
    %v340 = vpack.c.bf16 %v316, %v315
    %v341 = vpack.c.bf16 %v318, %v317
    %v342 = vpack.c.bf16 %v320, %v319
    %v343 = vpack.c.bf16 %v322, %v321
    %v344 = vpack.c.bf16 %v324, %v323
    %v345 = vpack.c.bf16 %v326, %v325
    %v346 = vpack.c.bf16 %v328, %v327
    %v347 = vpack.c.bf16 %v330, %v329
    %v348 = vpack.c.bf16 %v332, %v331
    %v349 = vld [vmem:[%s3] sm:$0xf]
    %v350 = vld [vmem:[%s3 + $0x4] sm:$0xf]
    %v351 = vld [vmem:[%s3 + $0x8] sm:$0xf]
    %v352 = vld [vmem:[%s3 + $0xc] sm:$0xf]
    %v353 = vld [vmem:[%s4] sm:$0x1]
    %v355 = vlaneseq
    %v356 = vshrl.u32 %v355, 7
    %v357 = vsub.s32 0, %v356
    %v358 = vrot.slane %v353, %v357
    %v364 = vunpack.c.l.b16 %v349
    %v365 = vunpack.c.l.b16 %v350
    %v366 = vunpack.c.l.b16 %v351
    %v367 = vunpack.c.l.b16 %v352
    %v368 = vpack.c.b16 %v365, %v364
    %v369 = vpack.c.b16 %v367, %v366
    %vm372 = vcmask 261120
    %v374 = vsel %vm372, %v333, 0
    %v377 = vsel %vm372, %v334, 0
    %v380 = vsel %vm372, %v335, 0
    %v383 = vsel %vm372, %v336, 0
    %v386 = vsel %vm372, %v337, 0
    %v389 = vsel %vm372, %v338, 0
    %v392 = vsel %vm372, %v339, 0
    %v395 = vsel %vm372, %v340, 0
    %v398 = vsel %vm372, %v341, 0
    %v401 = vsel %vm372, %v342, 0
    %v404 = vsel %vm372, %v343, 0
    %v407 = vsel %vm372, %v344, 0
    %v410 = vsel %vm372, %v345, 0
    %v413 = vsel %vm372, %v346, 0
    %v416 = vsel %vm372, %v347, 0
    %v419 = vsel %vm372, %v348, 0
    %421 = vmatprep.subr.bf16.mxu0 0
    %422 = vmatpush1.bf16.msra.mxu0 0
    %423 = vmatprep.subr.bf16.mxu0 0
    %424 = vmatpush1.bf16.msra.mxu0 0
    %425 = vmatprep.subr.bf16.mxu0 0
    %426 = vmatpush1.bf16.msra.mxu0 0
    %427 = vmatprep.subr.bf16.mxu0 0
    %428 = vmatpush1.bf16.msra.mxu0 0
    %429 = vmatprep.subr.bf16.mxu0 0
    %430 = vmatpush1.bf16.msra.mxu0 0
    %431 = vmatprep.subr.bf16.mxu0 0
    %432 = vmatpush1.bf16.msra.mxu0 0
    %433 = vmatprep.subr.bf16.mxu0 0
    %434 = vmatpush1.bf16.msra.mxu0 %v369
    %435 = vmatprep.subr.bf16.mxu0 0
    %436 = vmatpush1.bf16.msra.mxu0 %v368
    %437 = vmatprep.subr.bf16.mxu0 0
    %438 = vmatpush2.bf16.msra.mxu0 0
    %439 = vmatprep.subr.bf16.mxu0 0
    %440 = vmatpush2.bf16.msra.mxu0 0
    %441 = vmatprep.subr.bf16.mxu0 0
    %442 = vmatpush2.bf16.msra.mxu0 0
    %443 = vmatprep.subr.bf16.mxu0 0
    %444 = vmatpush2.bf16.msra.mxu0 0
    %445 = vmatprep.subr.bf16.mxu0 0
    %446 = vmatpush2.bf16.msra.mxu0 0
    %447 = vmatprep.subr.bf16.mxu0 0
    %448 = vmatpush2.bf16.msra.mxu0 0
    %449 = vmatprep.subr.bf16.mxu0 0
    %450 = vmatpush2.bf16.msra.mxu0 0
    %451 = vmatprep.subr.bf16.mxu0 0
    %452 = vmatpush2.bf16.msra.mxu0 0
    %453 = vmatprep.mubr.bf16.mxu0 0
    %454 = vmatmul.mubr.bf16.gmra.mxu0 %v374
    %v455 = vpop.f32.mrf.mxu0
    %v456 = vadd.f32 %v358, %v455
    %v457 = vpop.f32.mrf.mxu0
    %v458 = vpop.f32.mrf.mxu0
    %v459 = vadd.f32 %v358, %v458
    %v460 = vpop.f32.mrf.mxu0
    %461 = vmatprep.mubr.bf16.mxu0 0
    %462 = vmatmul.mubr.bf16.gmra.mxu0 %v377
    %v463 = vpop.f32.mrf.mxu0
    %v464 = vadd.f32 %v358, %v463
    %v465 = vpop.f32.mrf.mxu0
    %v466 = vpop.f32.mrf.mxu0
    %v467 = vadd.f32 %v358, %v466
    %v468 = vpop.f32.mrf.mxu0
    %469 = vmatprep.mubr.bf16.mxu0 0
    %470 = vmatmul.mubr.bf16.gmra.mxu0 %v380
    %v471 = vpop.f32.mrf.mxu0
    %v472 = vadd.f32 %v358, %v471
    %v473 = vpop.f32.mrf.mxu0
    %v474 = vpop.f32.mrf.mxu0
    %v475 = vadd.f32 %v358, %v474
    %v476 = vpop.f32.mrf.mxu0
    %477 = vmatprep.mubr.bf16.mxu0 0
    %478 = vmatmul.mubr.bf16.gmra.mxu0 %v383
    %v479 = vpop.f32.mrf.mxu0
    %v480 = vadd.f32 %v358, %v479
    %v481 = vpop.f32.mrf.mxu0
    %v482 = vpop.f32.mrf.mxu0
    %v483 = vadd.f32 %v358, %v482
    %v484 = vpop.f32.mrf.mxu0
    %485 = vmatprep.mubr.bf16.mxu0 0
    %486 = vmatmul.mubr.bf16.gmra.mxu0 %v386
    %v487 = vpop.f32.mrf.mxu0
    %v488 = vadd.f32 %v358, %v487
    %v489 = vpop.f32.mrf.mxu0
    %v490 = vpop.f32.mrf.mxu0
    %v491 = vadd.f32 %v358, %v490
    %v492 = vpop.f32.mrf.mxu0
    %493 = vmatprep.mubr.bf16.mxu0 0
    %494 = vmatmul.mubr.bf16.gmra.mxu0 %v389
    %v495 = vpop.f32.mrf.mxu0
    %v496 = vadd.f32 %v358, %v495
    %v497 = vpop.f32.mrf.mxu0
    %v498 = vpop.f32.mrf.mxu0
    %v499 = vadd.f32 %v358, %v498
    %v500 = vpop.f32.mrf.mxu0
    %501 = vmatprep.mubr.bf16.mxu0 0
    %502 = vmatmul.mubr.bf16.gmra.mxu0 %v392
    %v503 = vpop.f32.mrf.mxu0
    %v504 = vadd.f32 %v358, %v503
    %v505 = vpop.f32.mrf.mxu0
    %v506 = vpop.f32.mrf.mxu0
    %v507 = vadd.f32 %v358, %v506
    %v508 = vpop.f32.mrf.mxu0
    %509 = vmatprep.mubr.bf16.mxu0 0
    %510 = vmatmul.mubr.bf16.gmra.mxu0 %v395
    %v511 = vpop.f32.mrf.mxu0
    %v512 = vadd.f32 %v358, %v511
    %v513 = vpop.f32.mrf.mxu0
    %v514 = vpop.f32.mrf.mxu0
    %v515 = vadd.f32 %v358, %v514
    %v516 = vpop.f32.mrf.mxu0
    %517 = vmatprep.mubr.bf16.mxu0 0
    %518 = vmatmul.mubr.bf16.gmra.mxu0 %v398
    %v519 = vpop.f32.mrf.mxu0
    %v520 = vadd.f32 %v358, %v519
    %v521 = vpop.f32.mrf.mxu0
    %v522 = vpop.f32.mrf.mxu0
    %v523 = vadd.f32 %v358, %v522
    %v524 = vpop.f32.mrf.mxu0
    %525 = vmatprep.mubr.bf16.mxu0 0
    %526 = vmatmul.mubr.bf16.gmra.mxu0 %v401
    %v527 = vpop.f32.mrf.mxu0
    %v528 = vadd.f32 %v358, %v527
    %v529 = vpop.f32.mrf.mxu0
    %v530 = vpop.f32.mrf.mxu0
    %v531 = vadd.f32 %v358, %v530
    %v532 = vpop.f32.mrf.mxu0
    %533 = vmatprep.mubr.bf16.mxu0 0
    %534 = vmatmul.mubr.bf16.gmra.mxu0 %v404
    %v535 = vpop.f32.mrf.mxu0
    %v536 = vadd.f32 %v358, %v535
    %v537 = vpop.f32.mrf.mxu0
    %v538 = vpop.f32.mrf.mxu0
    %v539 = vadd.f32 %v358, %v538
    %v540 = vpop.f32.mrf.mxu0
    %541 = vmatprep.mubr.bf16.mxu0 0
    %542 = vmatmul.mubr.bf16.gmra.mxu0 %v407
    %v543 = vpop.f32.mrf.mxu0
    %v544 = vadd.f32 %v358, %v543
    %v545 = vpop.f32.mrf.mxu0
    %v546 = vpop.f32.mrf.mxu0
    %v547 = vadd.f32 %v358, %v546
    %v548 = vpop.f32.mrf.mxu0
    %549 = vmatprep.mubr.bf16.mxu0 0
    %550 = vmatmul.mubr.bf16.gmra.mxu0 %v410
    %v551 = vpop.f32.mrf.mxu0
    %v552 = vadd.f32 %v358, %v551
    %v553 = vpop.f32.mrf.mxu0
    %v554 = vpop.f32.mrf.mxu0
    %v555 = vadd.f32 %v358, %v554
    %v556 = vpop.f32.mrf.mxu0
    %557 = vmatprep.mubr.bf16.mxu0 0
    %558 = vmatmul.mubr.bf16.gmra.mxu0 %v413
    %v559 = vpop.f32.mrf.mxu0
    %v560 = vadd.f32 %v358, %v559
    %v561 = vpop.f32.mrf.mxu0
    %v562 = vpop.f32.mrf.mxu0
    %v563 = vadd.f32 %v358, %v562
    %v564 = vpop.f32.mrf.mxu0
    %565 = vmatprep.mubr.bf16.mxu0 0
    %566 = vmatmul.mubr.bf16.gmra.mxu0 %v416
    %v567 = vpop.f32.mrf.mxu0
    %v568 = vadd.f32 %v358, %v567
    %v569 = vpop.f32.mrf.mxu0
    %v570 = vpop.f32.mrf.mxu0
    %v571 = vadd.f32 %v358, %v570
    %v572 = vpop.f32.mrf.mxu0
    %573 = vmatprep.mubr.bf16.mxu0 0
    %574 = vmatmul.mubr.bf16.gmra.mxu0 %v419
    %v575 = vpop.f32.mrf.mxu0
    %v576 = vadd.f32 %v358, %v575
    %v577 = vpop.f32.mrf.mxu0
    %v578 = vpop.f32.mrf.mxu0
    %v579 = vadd.f32 %v358, %v578
    %v580 = vpop.f32.mrf.mxu0
    %581 = vdwg.mxu0
    %v582 = vtanh.pop %v456
    %v583 = vtanh.pop %v459
    %v584 = vtanh.pop %v464
    %v585 = vtanh.pop %v467
    %v586 = vtanh.pop %v472
    %v587 = vtanh.pop %v475
    %v588 = vtanh.pop %v480
    %v589 = vtanh.pop %v483
    %v590 = vtanh.pop %v488
    %v591 = vtanh.pop %v491
    %v592 = vtanh.pop %v496
    %v593 = vtanh.pop %v499
    %v594 = vtanh.pop %v504
    %v595 = vtanh.pop %v507
    %v596 = vtanh.pop %v512
    %v597 = vtanh.pop %v515
    %v598 = vtanh.pop %v520
    %v599 = vtanh.pop %v523
    %v600 = vtanh.pop %v528
    %v601 = vtanh.pop %v531
    %v602 = vtanh.pop %v536
    %v603 = vtanh.pop %v539
    %v604 = vtanh.pop %v544
    %v605 = vtanh.pop %v547
    %v606 = vtanh.pop %v552
    %v607 = vtanh.pop %v555
    %v608 = vtanh.pop %v560
    %v609 = vtanh.pop %v563
    %v610 = vtanh.pop %v568
    %v611 = vtanh.pop %v571
    %v612 = vtanh.pop %v576
    %v613 = vtanh.pop %v579
    %v614 = vpack.c.bf16 %v583, %v582
    %v615 = vpack.c.bf16 %v585, %v584
    %v616 = vpack.c.bf16 %v587, %v586
    %v617 = vpack.c.bf16 %v589, %v588
    %v618 = vpack.c.bf16 %v591, %v590
    %v619 = vpack.c.bf16 %v593, %v592
    %v620 = vpack.c.bf16 %v595, %v594
    %v621 = vpack.c.bf16 %v597, %v596
    %v622 = vpack.c.bf16 %v599, %v598
    %v623 = vpack.c.bf16 %v601, %v600
    %v624 = vpack.c.bf16 %v603, %v602
    %v625 = vpack.c.bf16 %v605, %v604
    %v626 = vpack.c.bf16 %v607, %v606
    %v627 = vpack.c.bf16 %v609, %v608
    %v628 = vpack.c.bf16 %v611, %v610
    %v629 = vpack.c.bf16 %v613, %v612
    %v630 = vld [vmem:[%s5] sm:$0xf]
    %v631 = vld [vmem:[%s5 + $0x4] sm:$0xf]
    %v632 = vld [vmem:[%s5 + $0x8] sm:$0xf]
    %v633 = vld [vmem:[%s5 + $0xc] sm:$0xf]
    %v634 = vld [vmem:[%s6] sm:$0x1]
    %v636 = vlaneseq
    %v637 = vshrl.u32 %v636, 7
    %v638 = vsub.s32 0, %v637
    %v639 = vrot.slane %v634, %v638
    %v645 = vunpack.c.l.b16 %v630
    %v646 = vunpack.c.l.b16 %v631
    %v647 = vunpack.c.l.b16 %v632
    %v648 = vunpack.c.l.b16 %v633
    %v649 = vpack.c.b16 %v646, %v645
    %v650 = vpack.c.b16 %v648, %v647
    %v654 = vsel %vm372, %v614, 0
    %v657 = vsel %vm372, %v615, 0
    %v660 = vsel %vm372, %v616, 0
    %v663 = vsel %vm372, %v617, 0
    %v666 = vsel %vm372, %v618, 0
    %v669 = vsel %vm372, %v619, 0
    %v672 = vsel %vm372, %v620, 0
    %v675 = vsel %vm372, %v621, 0
    %v678 = vsel %vm372, %v622, 0
    %v681 = vsel %vm372, %v623, 0
    %v684 = vsel %vm372, %v624, 0
    %v687 = vsel %vm372, %v625, 0
    %v690 = vsel %vm372, %v626, 0
    %v693 = vsel %vm372, %v627, 0
    %v696 = vsel %vm372, %v628, 0
    %v699 = vsel %vm372, %v629, 0
    %701 = vmatprep.subr.bf16.mxu0 0
    %702 = vmatpush1.bf16.msra.mxu0 0
    %703 = vmatprep.subr.bf16.mxu0 0
    %704 = vmatpush1.bf16.msra.mxu0 0
    %705 = vmatprep.subr.bf16.mxu0 0
    %706 = vmatpush1.bf16.msra.mxu0 0
    %707 = vmatprep.subr.bf16.mxu0 0
    %708 = vmatpush1.bf16.msra.mxu0 0
    %709 = vmatprep.subr.bf16.mxu0 0
    %710 = vmatpush1.bf16.msra.mxu0 0
    %711 = vmatprep.subr.bf16.mxu0 0
    %712 = vmatpush1.bf16.msra.mxu0 0
    %713 = vmatprep.subr.bf16.mxu0 0
    %714 = vmatpush1.bf16.msra.mxu0 %v650
    %715 = vmatprep.subr.bf16.mxu0 0
    %716 = vmatpush1.bf16.msra.mxu0 %v649
    %717 = vmatprep.subr.bf16.mxu0 0
    %718 = vmatpush2.bf16.msra.mxu0 0
    %719 = vmatprep.subr.bf16.mxu0 0
    %720 = vmatpush2.bf16.msra.mxu0 0
    %721 = vmatprep.subr.bf16.mxu0 0
    %722 = vmatpush2.bf16.msra.mxu0 0
    %723 = vmatprep.subr.bf16.mxu0 0
    %724 = vmatpush2.bf16.msra.mxu0 0
    %725 = vmatprep.subr.bf16.mxu0 0
    %726 = vmatpush2.bf16.msra.mxu0 0
    %727 = vmatprep.subr.bf16.mxu0 0
    %728 = vmatpush2.bf16.msra.mxu0 0
    %729 = vmatprep.subr.bf16.mxu0 0
    %730 = vmatpush2.bf16.msra.mxu0 0
    %731 = vmatprep.subr.bf16.mxu0 0
    %732 = vmatpush2.bf16.msra.mxu0 0
    %733 = vmatprep.mubr.bf16.mxu0 0
    %734 = vmatmul.mubr.bf16.gmra.mxu0 %v654
    %v735 = vpop.f32.mrf.mxu0
    %v736 = vadd.f32 %v639, %v735
    %v737 = vpop.f32.mrf.mxu0
    %v738 = vpop.f32.mrf.mxu0
    %v739 = vadd.f32 %v639, %v738
    %v740 = vpop.f32.mrf.mxu0
    %741 = vmatprep.mubr.bf16.mxu0 0
    %742 = vmatmul.mubr.bf16.gmra.mxu0 %v657
    %v743 = vpop.f32.mrf.mxu0
    %v744 = vadd.f32 %v639, %v743
    %v745 = vpop.f32.mrf.mxu0
    %v746 = vpop.f32.mrf.mxu0
    %v747 = vadd.f32 %v639, %v746
    %v748 = vpop.f32.mrf.mxu0
    %749 = vmatprep.mubr.bf16.mxu0 0
    %750 = vmatmul.mubr.bf16.gmra.mxu0 %v660
    %v751 = vpop.f32.mrf.mxu0
    %v752 = vadd.f32 %v639, %v751
    %v753 = vpop.f32.mrf.mxu0
    %v754 = vpop.f32.mrf.mxu0
    %v755 = vadd.f32 %v639, %v754
    %v756 = vpop.f32.mrf.mxu0
    %757 = vmatprep.mubr.bf16.mxu0 0
    %758 = vmatmul.mubr.bf16.gmra.mxu0 %v663
    %v759 = vpop.f32.mrf.mxu0
    %v760 = vadd.f32 %v639, %v759
    %v761 = vpop.f32.mrf.mxu0
    %v762 = vpop.f32.mrf.mxu0
    %v763 = vadd.f32 %v639, %v762
    %v764 = vpop.f32.mrf.mxu0
    %765 = vmatprep.mubr.bf16.mxu0 0
    %766 = vmatmul.mubr.bf16.gmra.mxu0 %v666
    %v767 = vpop.f32.mrf.mxu0
    %v768 = vadd.f32 %v639, %v767
    %v769 = vpop.f32.mrf.mxu0
    %v770 = vpop.f32.mrf.mxu0
    %v771 = vadd.f32 %v639, %v770
    %v772 = vpop.f32.mrf.mxu0
    %773 = vmatprep.mubr.bf16.mxu0 0
    %774 = vmatmul.mubr.bf16.gmra.mxu0 %v669
    %v775 = vpop.f32.mrf.mxu0
    %v776 = vadd.f32 %v639, %v775
    %v777 = vpop.f32.mrf.mxu0
    %v778 = vpop.f32.mrf.mxu0
    %v779 = vadd.f32 %v639, %v778
    %v780 = vpop.f32.mrf.mxu0
    %781 = vmatprep.mubr.bf16.mxu0 0
    %782 = vmatmul.mubr.bf16.gmra.mxu0 %v672
    %v783 = vpop.f32.mrf.mxu0
    %v784 = vadd.f32 %v639, %v783
    %v785 = vpop.f32.mrf.mxu0
    %v786 = vpop.f32.mrf.mxu0
    %v787 = vadd.f32 %v639, %v786
    %v788 = vpop.f32.mrf.mxu0
    %789 = vmatprep.mubr.bf16.mxu0 0
    %790 = vmatmul.mubr.bf16.gmra.mxu0 %v675
    %v791 = vpop.f32.mrf.mxu0
    %v792 = vadd.f32 %v639, %v791
    %v793 = vpop.f32.mrf.mxu0
    %v794 = vpop.f32.mrf.mxu0
    %v795 = vadd.f32 %v639, %v794
    %v796 = vpop.f32.mrf.mxu0
    %797 = vmatprep.mubr.bf16.mxu0 0
    %798 = vmatmul.mubr.bf16.gmra.mxu0 %v678
    %v799 = vpop.f32.mrf.mxu0
    %v800 = vadd.f32 %v639, %v799
    %v801 = vpop.f32.mrf.mxu0
    %v802 = vpop.f32.mrf.mxu0
    %v803 = vadd.f32 %v639, %v802
    %v804 = vpop.f32.mrf.mxu0
    %805 = vmatprep.mubr.bf16.mxu0 0
    %806 = vmatmul.mubr.bf16.gmra.mxu0 %v681
    %v807 = vpop.f32.mrf.mxu0
    %v808 = vadd.f32 %v639, %v807
    %v809 = vpop.f32.mrf.mxu0
    %v810 = vpop.f32.mrf.mxu0
    %v811 = vadd.f32 %v639, %v810
    %v812 = vpop.f32.mrf.mxu0
    %813 = vmatprep.mubr.bf16.mxu0 0
    %814 = vmatmul.mubr.bf16.gmra.mxu0 %v684
    %v815 = vpop.f32.mrf.mxu0
    %v816 = vadd.f32 %v639, %v815
    %v817 = vpop.f32.mrf.mxu0
    %v818 = vpop.f32.mrf.mxu0
    %v819 = vadd.f32 %v639, %v818
    %v820 = vpop.f32.mrf.mxu0
    %821 = vmatprep.mubr.bf16.mxu0 0
    %822 = vmatmul.mubr.bf16.gmra.mxu0 %v687
    %v823 = vpop.f32.mrf.mxu0
    %v824 = vadd.f32 %v639, %v823
    %v825 = vpop.f32.mrf.mxu0
    %v826 = vpop.f32.mrf.mxu0
    %v827 = vadd.f32 %v639, %v826
    %v828 = vpop.f32.mrf.mxu0
    %829 = vmatprep.mubr.bf16.mxu0 0
    %830 = vmatmul.mubr.bf16.gmra.mxu0 %v690
    %v831 = vpop.f32.mrf.mxu0
    %v832 = vadd.f32 %v639, %v831
    %v833 = vpop.f32.mrf.mxu0
    %v834 = vpop.f32.mrf.mxu0
    %v835 = vadd.f32 %v639, %v834
    %v836 = vpop.f32.mrf.mxu0
    %837 = vmatprep.mubr.bf16.mxu0 0
    %838 = vmatmul.mubr.bf16.gmra.mxu0 %v693
    %v839 = vpop.f32.mrf.mxu0
    %v840 = vadd.f32 %v639, %v839
    %v841 = vpop.f32.mrf.mxu0
    %v842 = vpop.f32.mrf.mxu0
    %v843 = vadd.f32 %v639, %v842
    %v844 = vpop.f32.mrf.mxu0
    %845 = vmatprep.mubr.bf16.mxu0 0
    %846 = vmatmul.mubr.bf16.gmra.mxu0 %v696
    %v847 = vpop.f32.mrf.mxu0
    %v848 = vadd.f32 %v639, %v847
    %v849 = vpop.f32.mrf.mxu0
    %v850 = vpop.f32.mrf.mxu0
    %v851 = vadd.f32 %v639, %v850
    %v852 = vpop.f32.mrf.mxu0
    %853 = vmatprep.mubr.bf16.mxu0 0
    %854 = vmatmul.mubr.bf16.gmra.mxu0 %v699
    %v855 = vpop.f32.mrf.mxu0
    %v856 = vadd.f32 %v639, %v855
    %v857 = vpop.f32.mrf.mxu0
    %v858 = vpop.f32.mrf.mxu0
    %v859 = vadd.f32 %v639, %v858
    %v860 = vpop.f32.mrf.mxu0
    %861 = vdwg.mxu0
    %862 = vst [vmem:[#allocation2] sm:$0xff] %v736
    %863 = vst [vmem:[#allocation2 + $0x8] sm:$0xff] %v739
    %864 = vst [vmem:[#allocation2 + $0x10] sm:$0xff] %v744
    %865 = vst [vmem:[#allocation2 + $0x18] sm:$0xff] %v747
    %866 = vst [vmem:[#allocation2 + $0x20] sm:$0xff] %v752
    %867 = vst [vmem:[#allocation2 + $0x28] sm:$0xff] %v755
    %868 = vst [vmem:[#allocation2 + $0x30] sm:$0xff] %v760
    %869 = vst [vmem:[#allocation2 + $0x38] sm:$0xff] %v763
    %870 = vst [vmem:[#allocation2 + $0x40] sm:$0xff] %v768
    %871 = vst [vmem:[#allocation2 + $0x48] sm:$0xff] %v771
    %872 = vst [vmem:[#allocation2 + $0x50] sm:$0xff] %v776
    %873 = vst [vmem:[#allocation2 + $0x58] sm:$0xff] %v779
    %874 = vst [vmem:[#allocation2 + $0x60] sm:$0xff] %v784
    %875 = vst [vmem:[#allocation2 + $0x68] sm:$0xff] %v787
    %876 = vst [vmem:[#allocation2 + $0x70] sm:$0xff] %v792
    %877 = vst [vmem:[#allocation2 + $0x78] sm:$0xff] %v795
    %878 = vst [vmem:[#allocation2 + $0x80] sm:$0xff] %v800
    %879 = vst [vmem:[#allocation2 + $0x88] sm:$0xff] %v803
    %880 = vst [vmem:[#allocation2 + $0x90] sm:$0xff] %v808
    %881 = vst [vmem:[#allocation2 + $0x98] sm:$0xff] %v811
    %882 = vst [vmem:[#allocation2 + $0xa0] sm:$0xff] %v816
    %883 = vst [vmem:[#allocation2 + $0xa8] sm:$0xff] %v819
    %884 = vst [vmem:[#allocation2 + $0xb0] sm:$0xff] %v824
    %885 = vst [vmem:[#allocation2 + $0xb8] sm:$0xff] %v827
    %886 = vst [vmem:[#allocation2 + $0xc0] sm:$0xff] %v832
    %887 = vst [vmem:[#allocation2 + $0xc8] sm:$0xff] %v835
    %888 = vst [vmem:[#allocation2 + $0xd0] sm:$0xff] %v840
    %889 = vst [vmem:[#allocation2 + $0xd8] sm:$0xff] %v843
    %890 = vst [vmem:[#allocation2 + $0xe0] sm:$0xff] %v848
    %891 = vst [vmem:[#allocation2 + $0xe8] sm:$0xff] %v851
    %892 = vst [vmem:[#allocation2 + $0xf0] sm:$0xff] %v856
    %893 = vst [vmem:[#allocation2 + $0xf8] sm:$0xff] %v859
    // Predicated region
    $region30: #{tpu_custom_call.1} parent=1 // pred_check
      _
    $region31: #{tpu_custom_call.1} parent=1 // pred_check_branch
      %895 = sbr.rel (0) target = $region33
    $region32: #{tpu_custom_call.1} parent=1 // pred_region
      %s897 = ssub.s32 4096, 4096
      %898 = vsyncadd [#allocation3], %s897
      %s899 = sshll.u32 [#allocation2], 4
      %s900 = int_to_ptr.vmem [resolvable:$true] %s899
      %905 = dma.vmem_to_hbm [thread:$0]  %s900, 4096, %s7, [#allocation3], 128, 128, 8
    $region33: #{tpu_custom_call.1} parent=1 // pred_fallthru
      _
    // Predicated region
    $region34: #{tpu_custom_call.1} parent=1 // pred_check
      _
    $region35: #{tpu_custom_call.1} parent=1 // pred_check_branch
      %907 = sbr.rel (0) target = $region37
    $region36: #{tpu_custom_call.1} parent=1 // pred_region
      %908 = dma.done [#allocation3], 4096
    $region37: #{tpu_custom_call.1} parent=1 // pred_fallthru
      _
    %909 = vsyncpa [#allocation3], 1

</llo_original>
